<compile_context>
chip_gen: v6e
topology: v6e:2x2x1
jax: 0.10.0
libtpu: 0.0.40
codegen_flags: <defaults>
</compile_context>

<pallas_src>
import functools

import jax
import jax.numpy as jnp
from jax.experimental import pallas as pl
from jax.experimental.pallas import tpu as pltpu


def _round_up(x, m):
    return (x + m - 1) // m * m


def _cdiv(a, b):
    return -(-a // b)


def _sigmoid(x):
    # sigmoid(x) == 0.5 * (1 + tanh(x/2)): single EUP transcendental, no divide.
    half = jnp.asarray(0.5, x.dtype)
    one = jnp.asarray(1.0, x.dtype)
    return half * (jnp.tanh(half * x) + one)


def _kancd_kernel(act_dtype,
                  stu_ref, exer_ref, kp_ref, kst_ref, kdf_ref,
                  w1T_ref, b1_ref, w2T_ref, b2_ref, w3T_ref, b3_ref,
                  w4_ref, scal_ref, out_ref):
    f32 = jnp.float32
    cdt = kst_ref.dtype                      # matmul operand dtype (bf16 or f32)

    # Dual D->K projections; w_stat / w_diff are already folded into the
    # resident knowledge weights, so these are plain MXU matmuls.
    s_stat = jnp.dot(stu_ref[...], kst_ref[...], preferred_element_type=f32) + scal_ref[0]
    s_diff = jnp.dot(exer_ref[...], kdf_ref[...], preferred_element_type=f32) + scal_ref[1]
    stat = _sigmoid(s_stat.astype(act_dtype))                 # (tb, K)
    kdiff = _sigmoid(s_diff.astype(act_dtype))
    state = kp_ref[...].astype(act_dtype) * (stat - kdiff)    # (tb, K)

    # Positive_MLP (eval mode => Dropout identity): MXU operands in `cdt`,
    # f32 accumulate, transcendentals in `act_dtype` (bf16 on v6e/v7x).
    h = jnp.tanh((jnp.dot(state.astype(cdt), w1T_ref[...],
                          preferred_element_type=f32) + b1_ref[...]).astype(act_dtype))
    h = jnp.tanh((jnp.dot(h.astype(cdt), w2T_ref[...],
                          preferred_element_type=f32) + b2_ref[...]).astype(act_dtype))
    h = jnp.tanh((jnp.dot(h.astype(cdt), w3T_ref[...],
                          preferred_element_type=f32) + b3_ref[...]).astype(act_dtype))

    # Final Linear(128 -> 1): contract the hidden axis of w4 (1, 128) against h
    # (tb, 128) so logits come out lane-dense as (1, tb) — no masked column store.
    logit = jax.lax.dot_general(w4_ref[...], h.astype(cdt),
                                (((1,), (1,)), ((), ())),
                                preferred_element_type=f32)              # (1, tb)
    out_ref[...] = _sigmoid(logit + scal_ref[2])[None]                   # (1, 1, tb)


def _choose_tiling(batch, block_b):
    """Lane-dense batch tile (multiple of 128), even tile count when possible
    so v7x's two TensorCores split the 'parallel' grid axis evenly."""
    b128 = _round_up(max(batch, 1), 128)
    if b128 <= 128:
        return 128, 1
    num_tiles = 2 * _cdiv(b128, 2 * max(block_b, 128))   # even
    tb = _round_up(_cdiv(b128, num_tiles), 128)
    return tb, num_tiles


def kancd_decoder_forward(z, student_id, exercise_id, knowledge_point, params, config,
                          *, block_b=512, compute_dtype=jnp.bfloat16, act_dtype=None):
    """Glue (gathers, padding, weight folding) in plain JAX; hot path in Pallas.

    compute_dtype: MXU operand dtype (bf16 recommended, f32 accumulation always).
    act_dtype: transcendental/elementwise dtype. Defaults to compute_dtype
               (bf16 on v6e/v7x). Pass jnp.float32 on v5e (no bf16 VPU/EUP).
    """
    if act_dtype is None:
        act_dtype = compute_dtype

    stu_num, prob_num = config['stu_num'], config['prob_num']
    know_num, dim = config['know_num'], config['out_channels']

    knowledge_ts = z[stu_num + prob_num:].astype(jnp.float32)        # (K, D)
    stu_emb = z[student_id].astype(jnp.float32)                      # (B, D)  gather = glue
    exer_emb = z[exercise_id].astype(jnp.float32)                    # (B, D)

    batch = student_id.shape[0]
    tb, num_tiles = _choose_tiling(batch, block_b)
    b_pad = tb * num_tiles
    pad = b_pad - batch

    stu = jnp.pad(stu_emb, ((0, pad), (0, 0))).astype(compute_dtype)            # (B_pad, D)
    exer = jnp.pad(exer_emb, ((0, pad), (0, 0))).astype(compute_dtype)          # (B_pad, D)
    kp = jnp.pad(knowledge_point.astype(jnp.float32),
                 ((0, pad), (0, 0))).astype(compute_dtype)                      # (B_pad, K)

    # Fold the two D->1 projection weights into the resident knowledge matrix
    # (one-time cost; no per-batch HBM pass, tighter bf16 numerics).
    kT_stat = (knowledge_ts * params['w_stat'][0]).T.astype(compute_dtype)      # (D, K)
    kT_diff = (knowledge_ts * params['w_diff'][0]).T.astype(compute_dtype)      # (D, K)

    w1T = params['w1'].T.astype(compute_dtype)               # (K, 512)   resident
    w2T = params['w2'].T.astype(compute_dtype)               # (512, 256)
    w3T = params['w3'].T.astype(compute_dtype)               # (256, 128)
    w4 = params['w4'].astype(compute_dtype)                  # (1, 128)
    b1 = params['b1'][None, :].astype(jnp.float32)           # (1, 512)
    b2 = params['b2'][None, :].astype(jnp.float32)           # (1, 256)
    b3 = params['b3'][None, :].astype(jnp.float32)           # (1, 128)
    scalars = jnp.concatenate([params['b_stat'].reshape(-1),
                               params['b_diff'].reshape(-1),
                               params['b4'].reshape(-1)]).astype(jnp.float32)   # (3,)

    h1, h2, h3 = w1T.shape[1], w2T.shape[1], w3T.shape[1]

    # --- VMEM budget estimate (double-buffered tiles + resident weights +
    # f32 intermediates, x2 headroom); only raise the scoped limit if needed.
    isz = jnp.dtype(compute_dtype).itemsize
    est = 2 * (2 * tb * dim * isz + tb * know_num * isz + tb * 4)                  # streamed tiles
    est += 2 * (2 * dim * know_num + know_num * h1 + h1 * h2 + h2 * h3 + h3) * isz  # weights
    est += 2 * (h1 + h2 + h3) * 4                                                   # biases
    est += tb * know_num * 4 * 4 + tb * (h1 + h2 + h3) * 4 * 2                      # intermediates
    est *= 2
    vmem_limit = min(int(est), 64 * 1024 * 1024) if est > 24 * 1024 * 1024 else None

    def const(shape):   # weight / bias: same block every grid step -> stays in VMEM
        return pl.BlockSpec(shape, lambda i: (0,) * len(shape))

    out = pl.pallas_call(
        functools.partial(_kancd_kernel, act_dtype),
        grid=(num_tiles,),
        in_specs=[
            pl.BlockSpec((tb, dim), lambda i: (i, 0)),            # stu_emb tile
            pl.BlockSpec((tb, dim), lambda i: (i, 0)),            # exer_emb tile
            pl.BlockSpec((tb, know_num), lambda i: (i, 0)),       # knowledge_point tile
            const((dim, know_num)),                               # kT_stat (W_stat folded)
            const((dim, know_num)),                               # kT_diff (W_diff folded)
            const((know_num, h1)), const((1, h1)),                # L1
            const((h1, h2)), const((1, h2)),                      # L2
            const((h2, h3)), const((1, h3)),                      # L3
            const((1, h3)),                                       # w4
            pl.BlockSpec(memory_space=pltpu.MemorySpace.SMEM),    # scalar biases
        ],
        out_specs=pl.BlockSpec((1, 1, tb), lambda i: (i, 0, 0)),  # lane-dense store
        out_shape=jax.ShapeDtypeStruct((num_tiles, 1, tb), jnp.float32),
        compiler_params=pltpu.CompilerParams(
            dimension_semantics=("parallel",),                    # megacore / v7x 2-TC
            vmem_limit_bytes=vmem_limit),
    )(stu, exer, kp, kT_stat, kT_diff, w1T, b1, w2T, b2, w3T, b3, w4, scalars)

    return out.reshape(-1)[:batch]


def _xavier_normal(key, shape):
    fan_out, fan_in = shape
    std = (2.0 / (fan_in + fan_out)) ** 0.5
    return std * jax.random.normal(key, shape, dtype=jnp.float32)


def init_params(key, config):
    D = config['out_channels']
    K = config['know_num']
    hidden = 512
    ks = jax.random.split(key, 6)
    return {
        'w_stat': _xavier_normal(ks[0], (1, D)),
        'b_stat': jnp.zeros((1, 1), jnp.float32),
        'w_diff': _xavier_normal(ks[1], (1, D)),
        'b_diff': jnp.zeros((1, 1), jnp.float32),
        'w1': _xavier_normal(ks[2], (hidden, K)),
        'b1': jnp.zeros((hidden,), jnp.float32),
        'w2': _xavier_normal(ks[3], (hidden // 2, hidden)),
        'b2': jnp.zeros((hidden // 2,), jnp.float32),
        'w3': _xavier_normal(ks[4], (hidden // 4, hidden // 2)),
        'b3': jnp.zeros((hidden // 4,), jnp.float32),
        'w4': _xavier_normal(ks[5], (1, hidden // 4)),
        'b4': jnp.zeros((1,), jnp.float32),
    }


def reference_forward(z, student_id, exercise_id, knowledge_point, params, config):
    """Pure-JAX f32 mirror of the PyTorch forward (eval mode) for validation."""
    stu_num, prob_num = config['stu_num'], config['prob_num']
    kts = z[stu_num + prob_num:]                          # (K, D)
    stu = z[student_id][:, None, :]                       # (B, 1, D)
    exer = z[exercise_id][:, None, :]
    kemb = kts[None, :, :]                                # (1, K, D)
    stat = jax.nn.sigmoid(jnp.sum(stu * kemb * params['w_stat'][0], -1) + params['b_stat'][0, 0])
    kdiff = jax.nn.sigmoid(jnp.sum(exer * kemb * params['w_diff'][0], -1) + params['b_diff'][0, 0])
    state = knowledge_point * (stat - kdiff)
    h = jnp.tanh(state @ params['w1'].T + params['b1'])
    h = jnp.tanh(h @ params['w2'].T + params['b2'])
    h = jnp.tanh(h @ params['w3'].T + params['b3'])
    return jax.nn.sigmoid(h @ params['w4'].T + params['b4']).reshape(-1)


if __name__ == "__main__":
    # TODO(synk): training-mode Dropout (RNG masks) is not implemented; the
    # kernel reproduces eval-mode (inference) semantics of the module.
    config = {'stu_num': 8, 'prob_num': 8, 'know_num': 64, 'out_channels': 32}
    batch = 8
    n_rows = config['stu_num'] + config['prob_num'] + config['know_num']

    key = jax.random.PRNGKey(0)
    k_z, k_sid, k_eid, k_kp, k_par = jax.random.split(key, 5)

    z = jax.random.normal(k_z, (n_rows, config['out_channels']), dtype=jnp.float32)
    student_id = jax.random.randint(k_sid, (batch,), 0, config['stu_num'])
    exercise_id = jax.random.randint(
        k_eid, (batch,), config['stu_num'], config['stu_num'] + config['prob_num'])
    knowledge_point = jax.random.bernoulli(
        k_kp, 0.3, (batch, config['know_num'])).astype(jnp.float32)

    params = init_params(k_par, config)
    ref = reference_forward(z, student_id, exercise_id, knowledge_point, params, config)

    # Low-precision production path: bf16 MXU operands + bf16 transcendentals
    # (v6e/v7x). Loose tolerance for the bf16 roundings.
    out_bf16 = kancd_decoder_forward(z, student_id, exercise_id, knowledge_point,
                                     params, config, compute_dtype=jnp.bfloat16)
    out_bf16 = jax.block_until_ready(out_bf16)
    assert out_bf16.shape == (batch,)
    assert jnp.allclose(out_bf16, ref, rtol=3e-2, atol=3e-2), (out_bf16, ref)

    # f32 path (also the v5e-style act_dtype=f32 path): tight check that the
    # fused / gridded structure is exact.
    out_f32 = kancd_decoder_forward(z, student_id, exercise_id, knowledge_point,
                                    params, config, compute_dtype=jnp.float32,
                                    act_dtype=jnp.float32)
    out_f32 = jax.block_until_ready(out_f32)
    assert jnp.allclose(out_f32, ref, rtol=1e-4, atol=1e-4), (out_f32, ref)

    print("KERNEL_OK")
</pallas_src>

<mosaic_0001>
module attributes {stable_mosaic.version = 11 : i64} {
  func.func @_kancd_kernel(%arg0: i32, %arg1: memref<128x32xbf16, #tpu.memory_space<vmem>>, %arg2: memref<128x32xbf16, #tpu.memory_space<vmem>>, %arg3: memref<128x64xbf16, #tpu.memory_space<vmem>>, %arg4: memref<32x64xbf16, #tpu.memory_space<vmem>>, %arg5: memref<32x64xbf16, #tpu.memory_space<vmem>>, %arg6: memref<64x512xbf16, #tpu.memory_space<vmem>>, %arg7: memref<1x512xf32, #tpu.memory_space<vmem>>, %arg8: memref<512x256xbf16, #tpu.memory_space<vmem>>, %arg9: memref<1x256xf32, #tpu.memory_space<vmem>>, %arg10: memref<256x128xbf16, #tpu.memory_space<vmem>>, %arg11: memref<1x128xf32, #tpu.memory_space<vmem>>, %arg12: memref<1x128xbf16, #tpu.memory_space<vmem>>, %arg13: memref<3xf32, #tpu.memory_space<smem>>, %arg14: memref<1x1x128xf32, #tpu.memory_space<vmem>>) attributes {dimension_semantics = [#tpu.dimension_semantics<parallel>], iteration_bounds = array<i64: 1>, scalar_prefetch = 0 : i64, scratch_operands = 0 : i64, tpu.core_type = #tpu.core_type<tc>, window_params = [{transform_indices = @transform_0, window_bounds = array<i64: 128, 32>}, {transform_indices = @transform_1, window_bounds = array<i64: 128, 32>}, {transform_indices = @transform_2, window_bounds = array<i64: 128, 64>}, {pipeline_mode = #tpu.pipeline_mode<synchronous>, transform_indices = @transform_3, window_bounds = array<i64: 32, 64>}, {pipeline_mode = #tpu.pipeline_mode<synchronous>, transform_indices = @transform_4, window_bounds = array<i64: 32, 64>}, {pipeline_mode = #tpu.pipeline_mode<synchronous>, transform_indices = @transform_5, window_bounds = array<i64: 64, 512>}, {pipeline_mode = #tpu.pipeline_mode<synchronous>, transform_indices = @transform_6, window_bounds = array<i64: 1, 512>}, {pipeline_mode = #tpu.pipeline_mode<synchronous>, transform_indices = @transform_7, window_bounds = array<i64: 512, 256>}, {pipeline_mode = #tpu.pipeline_mode<synchronous>, transform_indices = @transform_8, window_bounds = array<i64: 1, 256>}, {pipeline_mode = #tpu.pipeline_mode<synchronous>, transform_indices = @transform_9, window_bounds = array<i64: 256, 128>}, {pipeline_mode = #tpu.pipeline_mode<synchronous>, transform_indices = @transform_10, window_bounds = array<i64: 1, 128>}, {pipeline_mode = #tpu.pipeline_mode<synchronous>, transform_indices = @transform_11, window_bounds = array<i64: 1, 128>}, {transform_indices = @transform_12, window_bounds = array<i64: 3>}, {transform_indices = @transform_13, window_bounds = array<i64: 1, 1, 128>}]} {
    %c0 = arith.constant 0 : index
    %c0_0 = arith.constant 0 : index
    %0 = vector.load %arg1[%c0, %c0_0] : memref<128x32xbf16, #tpu.memory_space<vmem>>, vector<128x32xbf16>
    %c0_1 = arith.constant 0 : index
    %c0_2 = arith.constant 0 : index
    %1 = vector.load %arg4[%c0_1, %c0_2] : memref<32x64xbf16, #tpu.memory_space<vmem>>, vector<32x64xbf16>
    %cst = arith.constant dense<0.000000e+00> : vector<128x64xf32>
    %2 = tpu.matmul %0, %1, %cst {dimension_numbers = #tpu.dot_dimension_numbers<[1], [0], [0], [1], [0, 0, 1, 1], [], []>} : vector<128x32xbf16>, vector<32x64xbf16>, vector<128x64xf32> -> vector<128x64xf32>
    %c0_3 = arith.constant 0 : index
    %3 = memref.load %arg13[%c0_3] : memref<3xf32, #tpu.memory_space<smem>>
    %4 = vector.broadcast %3 : f32 to vector<128x64xf32>
    %5 = arith.addf %2, %4 : vector<128x64xf32>
    %c0_4 = arith.constant 0 : index
    %c0_5 = arith.constant 0 : index
    %6 = vector.load %arg2[%c0_4, %c0_5] : memref<128x32xbf16, #tpu.memory_space<vmem>>, vector<128x32xbf16>
    %c0_6 = arith.constant 0 : index
    %c0_7 = arith.constant 0 : index
    %7 = vector.load %arg5[%c0_6, %c0_7] : memref<32x64xbf16, #tpu.memory_space<vmem>>, vector<32x64xbf16>
    %cst_8 = arith.constant dense<0.000000e+00> : vector<128x64xf32>
    %8 = tpu.matmul %6, %7, %cst_8 {dimension_numbers = #tpu.dot_dimension_numbers<[1], [0], [0], [1], [0, 0, 1, 1], [], []>} : vector<128x32xbf16>, vector<32x64xbf16>, vector<128x64xf32> -> vector<128x64xf32>
    %c1 = arith.constant 1 : index
    %9 = memref.load %arg13[%c1] : memref<3xf32, #tpu.memory_space<smem>>
    %10 = vector.broadcast %9 : f32 to vector<128x64xf32>
    %11 = arith.addf %8, %10 : vector<128x64xf32>
    %12 = arith.truncf %5 : vector<128x64xf32> to vector<128x64xbf16>
    %cst_9 = arith.constant 5.000000e-01 : bf16
    %13 = vector.broadcast %cst_9 : bf16 to vector<128x64xbf16>
    %14 = arith.mulf %13, %12 : vector<128x64xbf16>
    %15 = math.tanh %14 : vector<128x64xbf16>
    %cst_10 = arith.constant 1.000000e+00 : bf16
    %16 = vector.broadcast %cst_10 : bf16 to vector<128x64xbf16>
    %17 = arith.addf %15, %16 : vector<128x64xbf16>
    %cst_11 = arith.constant 5.000000e-01 : bf16
    %18 = vector.broadcast %cst_11 : bf16 to vector<128x64xbf16>
    %19 = arith.mulf %18, %17 : vector<128x64xbf16>
    %20 = arith.truncf %11 : vector<128x64xf32> to vector<128x64xbf16>
    %cst_12 = arith.constant 5.000000e-01 : bf16
    %21 = vector.broadcast %cst_12 : bf16 to vector<128x64xbf16>
    %22 = arith.mulf %21, %20 : vector<128x64xbf16>
    %23 = math.tanh %22 : vector<128x64xbf16>
    %cst_13 = arith.constant 1.000000e+00 : bf16
    %24 = vector.broadcast %cst_13 : bf16 to vector<128x64xbf16>
    %25 = arith.addf %23, %24 : vector<128x64xbf16>
    %cst_14 = arith.constant 5.000000e-01 : bf16
    %26 = vector.broadcast %cst_14 : bf16 to vector<128x64xbf16>
    %27 = arith.mulf %26, %25 : vector<128x64xbf16>
    %c0_15 = arith.constant 0 : index
    %c0_16 = arith.constant 0 : index
    %28 = vector.load %arg3[%c0_15, %c0_16] : memref<128x64xbf16, #tpu.memory_space<vmem>>, vector<128x64xbf16>
    %29 = arith.subf %19, %27 : vector<128x64xbf16>
    %30 = arith.mulf %28, %29 : vector<128x64xbf16>
    %c0_17 = arith.constant 0 : index
    %c0_18 = arith.constant 0 : index
    %31 = vector.load %arg6[%c0_17, %c0_18] : memref<64x512xbf16, #tpu.memory_space<vmem>>, vector<64x512xbf16>
    %cst_19 = arith.constant dense<0.000000e+00> : vector<128x512xf32>
    %32 = tpu.matmul %30, %31, %cst_19 {dimension_numbers = #tpu.dot_dimension_numbers<[1], [0], [0], [1], [0, 0, 1, 1], [], []>} : vector<128x64xbf16>, vector<64x512xbf16>, vector<128x512xf32> -> vector<128x512xf32>
    %c0_20 = arith.constant 0 : index
    %c0_21 = arith.constant 0 : index
    %33 = vector.load %arg7[%c0_20, %c0_21] : memref<1x512xf32, #tpu.memory_space<vmem>>, vector<1x512xf32>
    %34 = vector.broadcast %33 : vector<1x512xf32> to vector<128x512xf32>
    %35 = arith.addf %32, %34 : vector<128x512xf32>
    %36 = arith.truncf %35 : vector<128x512xf32> to vector<128x512xbf16>
    %37 = math.tanh %36 : vector<128x512xbf16>
    %c0_22 = arith.constant 0 : index
    %c0_23 = arith.constant 0 : index
    %38 = vector.load %arg8[%c0_22, %c0_23] : memref<512x256xbf16, #tpu.memory_space<vmem>>, vector<512x256xbf16>
    %cst_24 = arith.constant dense<0.000000e+00> : vector<128x256xf32>
    %39 = tpu.matmul %37, %38, %cst_24 {dimension_numbers = #tpu.dot_dimension_numbers<[1], [0], [0], [1], [0, 0, 1, 1], [], []>} : vector<128x512xbf16>, vector<512x256xbf16>, vector<128x256xf32> -> vector<128x256xf32>
    %c0_25 = arith.constant 0 : index
    %c0_26 = arith.constant 0 : index
    %40 = vector.load %arg9[%c0_25, %c0_26] : memref<1x256xf32, #tpu.memory_space<vmem>>, vector<1x256xf32>
    %41 = vector.broadcast %40 : vector<1x256xf32> to vector<128x256xf32>
    %42 = arith.addf %39, %41 : vector<128x256xf32>
    %43 = arith.truncf %42 : vector<128x256xf32> to vector<128x256xbf16>
    %44 = math.tanh %43 : vector<128x256xbf16>
    %c0_27 = arith.constant 0 : index
    %c0_28 = arith.constant 0 : index
    %45 = vector.load %arg10[%c0_27, %c0_28] : memref<256x128xbf16, #tpu.memory_space<vmem>>, vector<256x128xbf16>
    %cst_29 = arith.constant dense<0.000000e+00> : vector<128x128xf32>
    %46 = tpu.matmul %44, %45, %cst_29 {dimension_numbers = #tpu.dot_dimension_numbers<[1], [0], [0], [1], [0, 0, 1, 1], [], []>} : vector<128x256xbf16>, vector<256x128xbf16>, vector<128x128xf32> -> vector<128x128xf32>
    %c0_30 = arith.constant 0 : index
    %c0_31 = arith.constant 0 : index
    %47 = vector.load %arg11[%c0_30, %c0_31] : memref<1x128xf32, #tpu.memory_space<vmem>>, vector<1x128xf32>
    %48 = vector.broadcast %47 : vector<1x128xf32> to vector<128x128xf32>
    %49 = arith.addf %46, %48 : vector<128x128xf32>
    %50 = arith.truncf %49 : vector<128x128xf32> to vector<128x128xbf16>
    %51 = math.tanh %50 : vector<128x128xbf16>
    %c0_32 = arith.constant 0 : index
    %c0_33 = arith.constant 0 : index
    %52 = vector.load %arg12[%c0_32, %c0_33] : memref<1x128xbf16, #tpu.memory_space<vmem>>, vector<1x128xbf16>
    %cst_34 = arith.constant dense<0.000000e+00> : vector<1x128xf32>
    %53 = tpu.matmul %52, %51, %cst_34 {dimension_numbers = #tpu.dot_dimension_numbers<[1], [1], [0], [0], [0, 0, 1, 0], [], []>} : vector<1x128xbf16>, vector<128x128xbf16>, vector<1x128xf32> -> vector<1x128xf32>
    %c2 = arith.constant 2 : index
    %54 = memref.load %arg13[%c2] : memref<3xf32, #tpu.memory_space<smem>>
    %55 = vector.broadcast %54 : f32 to vector<1x128xf32>
    %56 = arith.addf %53, %55 : vector<1x128xf32>
    %cst_35 = arith.constant 5.000000e-01 : f32
    %57 = vector.broadcast %cst_35 : f32 to vector<1x128xf32>
    %58 = arith.mulf %57, %56 : vector<1x128xf32>
    %59 = math.tanh %58 : vector<1x128xf32>
    %cst_36 = arith.constant 1.000000e+00 : f32
    %60 = vector.broadcast %cst_36 : f32 to vector<1x128xf32>
    %61 = arith.addf %59, %60 : vector<1x128xf32>
    %cst_37 = arith.constant 5.000000e-01 : f32
    %62 = vector.broadcast %cst_37 : f32 to vector<1x128xf32>
    %63 = arith.mulf %62, %61 : vector<1x128xf32>
    %64 = vector.shape_cast %63 : vector<1x128xf32> to vector<1x1x128xf32>
    %c0_38 = arith.constant 0 : index
    %c0_39 = arith.constant 0 : index
    %c0_40 = arith.constant 0 : index
    %65 = vector.load %arg14[%c0_38, %c0_39, %c0_40] : memref<1x1x128xf32, #tpu.memory_space<vmem>>, vector<1x1x128xf32>
    tpu.vector_store %arg14[%c0_38, %c0_39, %c0_40], %64 {strides = array<i32>} : memref<1x1x128xf32, #tpu.memory_space<vmem>>, vector<1x1x128xf32>,
    return
  }
  func.func @transform_0(%arg0: i32) -> (i32, i32) {
    %c0_i32 = arith.constant 0 : i32
    %c0_i32_0 = arith.constant 0 : i32
    return %arg0, %c0_i32 : i32, i32
  }
  func.func @transform_1(%arg0: i32) -> (i32, i32) {
    %c0_i32 = arith.constant 0 : i32
    %c0_i32_0 = arith.constant 0 : i32
    return %arg0, %c0_i32 : i32, i32
  }
  func.func @transform_2(%arg0: i32) -> (i32, i32) {
    %c0_i32 = arith.constant 0 : i32
    %c0_i32_0 = arith.constant 0 : i32
    return %arg0, %c0_i32 : i32, i32
  }
  func.func @transform_3(%arg0: i32) -> (i32, i32) {
    %c0_i32 = arith.constant 0 : i32
    %c0_i32_0 = arith.constant 0 : i32
    %c0_i32_1 = arith.constant 0 : i32
    return %c0_i32, %c0_i32_0 : i32, i32
  }
  func.func @transform_4(%arg0: i32) -> (i32, i32) {
    %c0_i32 = arith.constant 0 : i32
    %c0_i32_0 = arith.constant 0 : i32
    %c0_i32_1 = arith.constant 0 : i32
    return %c0_i32, %c0_i32_0 : i32, i32
  }
  func.func @transform_5(%arg0: i32) -> (i32, i32) {
    %c0_i32 = arith.constant 0 : i32
    %c0_i32_0 = arith.constant 0 : i32
    %c0_i32_1 = arith.constant 0 : i32
    return %c0_i32, %c0_i32_0 : i32, i32
  }
  func.func @transform_6(%arg0: i32) -> (i32, i32) {
    %c0_i32 = arith.constant 0 : i32
    %c0_i32_0 = arith.constant 0 : i32
    %c0_i32_1 = arith.constant 0 : i32
    return %c0_i32, %c0_i32_0 : i32, i32
  }
  func.func @transform_7(%arg0: i32) -> (i32, i32) {
    %c0_i32 = arith.constant 0 : i32
    %c0_i32_0 = arith.constant 0 : i32
    %c0_i32_1 = arith.constant 0 : i32
    return %c0_i32, %c0_i32_0 : i32, i32
  }
  func.func @transform_8(%arg0: i32) -> (i32, i32) {
    %c0_i32 = arith.constant 0 : i32
    %c0_i32_0 = arith.constant 0 : i32
    %c0_i32_1 = arith.constant 0 : i32
    return %c0_i32, %c0_i32_0 : i32, i32
  }
  func.func @transform_9(%arg0: i32) -> (i32, i32) {
    %c0_i32 = arith.constant 0 : i32
    %c0_i32_0 = arith.constant 0 : i32
    %c0_i32_1 = arith.constant 0 : i32
    return %c0_i32, %c0_i32_0 : i32, i32
  }
  func.func @transform_10(%arg0: i32) -> (i32, i32) {
    %c0_i32 = arith.constant 0 : i32
    %c0_i32_0 = arith.constant 0 : i32
    %c0_i32_1 = arith.constant 0 : i32
    return %c0_i32, %c0_i32_0 : i32, i32
  }
  func.func @transform_11(%arg0: i32) -> (i32, i32) {
    %c0_i32 = arith.constant 0 : i32
    %c0_i32_0 = arith.constant 0 : i32
    %c0_i32_1 = arith.constant 0 : i32
    return %c0_i32, %c0_i32_0 : i32, i32
  }
  func.func @transform_12(%arg0: i32) -> i32 {
    %c0_i32 = arith.constant 0 : i32
    %c0_i32_0 = arith.constant 0 : i32
    return %c0_i32 : i32
  }
  func.func @transform_13(%arg0: i32) -> (i32, i32, i32) {
    %c0_i32 = arith.constant 0 : i32
    %c0_i32_0 = arith.constant 0 : i32
    %c0_i32_1 = arith.constant 0 : i32
    return %arg0, %c0_i32, %c0_i32_0 : i32, i32, i32
  }
}

</mosaic_0001>

<llo_original>
// kernel: tpu_custom_call.1
$region0: #{tpu_custom_call.1}
  #allocation0 [shape = 'u32[]', space=smem, size = 0x4, offset = 0x4, fixed_abs, tag = 'smem constant byte address 0x4 - core index']
  #allocation1 [shape = 'u32[144,128]{1,0:T(1,128)}', space=vmem, size = 0x12000, scoped, tag = 'internal scratch']
  %s0 = inlined_call_operand.vmem [shape: bf16[128,32], index: 0, kind: input, shape index: {}]
  %s1 = inlined_call_operand.vmem [shape: bf16[128,32], index: 1, kind: input, shape index: {}]
  %s2 = inlined_call_operand.vmem [shape: bf16[128,64], index: 2, kind: input, shape index: {}]
  %s3 = inlined_call_operand.hbm [shape: bf16[32,64], index: 3, kind: input, shape index: {}]
  %s4 = inlined_call_operand.hbm [shape: bf16[32,64], index: 4, kind: input, shape index: {}]
  %s5 = inlined_call_operand.vmem [shape: bf16[64,512], index: 5, kind: input, shape index: {}]
  %s6 = inlined_call_operand.vmem [shape: f32[1,512], index: 6, kind: input, shape index: {}]
  %s7 = inlined_call_operand.hbm [shape: bf16[512,256], index: 7, kind: input, shape index: {}]
  %s8 = inlined_call_operand.vmem [shape: f32[1,256], index: 8, kind: input, shape index: {}]
  %s9 = inlined_call_operand.vmem [shape: bf16[256,128], index: 9, kind: input, shape index: {}]
  %s10 = inlined_call_operand.vmem [shape: f32[1,128], index: 10, kind: input, shape index: {}]
  %s11 = inlined_call_operand.vmem [shape: bf16[1,128], index: 11, kind: input, shape index: {}]
  %s12 = inlined_call_operand.vmem [shape: f32[3], index: 12, kind: input, shape index: {}]
  %s13 = inlined_call_operand.hbm [shape: f32[1,1,128], index: 13, kind: output, shape index: {}]
  %s14 = sld [smem:[#allocation0]]
  $region78: #{tpu_custom_call.1} parent=0
    _
  %s16 = ssub.s32 1, %s14
  %s17 = scalar_select 0, %s16, %s14
  $region1: #{tpu_custom_call.1} parent=0
    #allocation2 [shape = 'u8[8192]{0}', space=vmem, size = 0x2000, scoped, tag = 'input window, operand 3, single buffered']
    #allocation3 [shape = 's32[1]{0}', space=sflag, size = 0x4, scoped, tag = 'scoped memory for tpu_custom_call.1']
    #allocation4 [shape = 's32[1]{0}', space=sflag, size = 0x4, scoped, tag = 'scoped memory for tpu_custom_call.1']
    #allocation5 [shape = 's32[1]{0}', space=sflag, size = 0x4, scoped, tag = 'scoped memory for tpu_custom_call.1']
    #allocation6 [shape = 'u8[8192]{0}', space=vmem, size = 0x2000, scoped, tag = 'input window, operand 4, single buffered']
    #allocation7 [shape = 's32[1]{0}', space=sflag, size = 0x4, scoped, tag = 'scoped memory for tpu_custom_call.1']
    #allocation8 [shape = 'u8[262144]{0}', space=vmem, size = 0x40000, scoped, tag = 'input window, operand 7, single buffered']
    #allocation9 [shape = 'u8[512]{0}', space=smem, size = 0x200, scoped, tag = 'input window, operand 12, single buffered']
    #allocation10 [shape = 'u8[512]{0}', space=vmem, size = 0x400, scoped, tag = 'output window, operand 0, single buffered']
    %18 = vsyncpa [#allocation3], 0
    %19 = vsyncpa [#allocation7], 0
    %20 = vsyncpa [#allocation5], 0
    %21 = vsyncpa [#allocation4], 0
    // Predicated region
    $region2: #{tpu_custom_call.1} parent=1 // pred_check
      _
    $region3: #{tpu_custom_call.1} parent=1 // pred_check_branch
      %23 = sbr.rel (0) target = $region5
    $region4: #{tpu_custom_call.1} parent=1 // pred_region
      _
    $region5: #{tpu_custom_call.1} parent=1 // pred_fallthru
      _
    // Predicated region
    $region6: #{tpu_custom_call.1} parent=1 // pred_check
      _
    $region7: #{tpu_custom_call.1} parent=1 // pred_check_branch
      %25 = sbr.rel (0) target = $region9
    $region8: #{tpu_custom_call.1} parent=1 // pred_region
      _
    $region9: #{tpu_custom_call.1} parent=1 // pred_fallthru
      _
    // Predicated region
    $region10: #{tpu_custom_call.1} parent=1 // pred_check
      _
    $region11: #{tpu_custom_call.1} parent=1 // pred_check_branch
      %27 = sbr.rel (0) target = $region13
    $region12: #{tpu_custom_call.1} parent=1 // pred_region
      _
    $region13: #{tpu_custom_call.1} parent=1 // pred_fallthru
      _
    // Predicated region
    $region14: #{tpu_custom_call.1} parent=1 // pred_check
      _
    $region15: #{tpu_custom_call.1} parent=1 // pred_check_branch
      %29 = sbr.rel (0) target = $region17
    $region16: #{tpu_custom_call.1} parent=1 // pred_region
      %s31 = ssub.s32 256, 256
      %32 = vsyncadd [#allocation3], %s31
      %s33 = sshll.u32 [#allocation2], 4
      %s34 = int_to_ptr.vmem [resolvable:$true] %s33
      %39 = dma.hbm_to_vmem [thread:$0]  %s3, 256, %s34, [#allocation3], 64, 64, 4
    $region17: #{tpu_custom_call.1} parent=1 // pred_fallthru
      _
    // Predicated region
    $region18: #{tpu_custom_call.1} parent=1 // pred_check
      _
    $region19: #{tpu_custom_call.1} parent=1 // pred_check_branch
      %41 = sbr.rel (0) target = $region21
    $region20: #{tpu_custom_call.1} parent=1 // pred_region
      %s43 = ssub.s32 256, 256
      %44 = vsyncadd [#allocation7], %s43
      %s45 = sshll.u32 [#allocation6], 4
      %s46 = int_to_ptr.vmem [resolvable:$true] %s45
      %51 = dma.hbm_to_vmem [thread:$0]  %s4, 256, %s46, [#allocation7], 64, 64, 4
    $region21: #{tpu_custom_call.1} parent=1 // pred_fallthru
      _
    // Predicated region
    $region22: #{tpu_custom_call.1} parent=1 // pred_check
      _
    $region23: #{tpu_custom_call.1} parent=1 // pred_check_branch
      %53 = sbr.rel (0) target = $region25
    $region24: #{tpu_custom_call.1} parent=1 // pred_region
      _
    $region25: #{tpu_custom_call.1} parent=1 // pred_fallthru
      _
    // Predicated region
    $region26: #{tpu_custom_call.1} parent=1 // pred_check
      _
    $region27: #{tpu_custom_call.1} parent=1 // pred_check_branch
      %55 = sbr.rel (0) target = $region29
    $region28: #{tpu_custom_call.1} parent=1 // pred_region
      _
    $region29: #{tpu_custom_call.1} parent=1 // pred_fallthru
      _
    // Predicated region
    $region30: #{tpu_custom_call.1} parent=1 // pred_check
      _
    $region31: #{tpu_custom_call.1} parent=1 // pred_check_branch
      %57 = sbr.rel (0) target = $region33
    $region32: #{tpu_custom_call.1} parent=1 // pred_region
      %s59 = ssub.s32 8192, 8192
      %60 = vsyncadd [#allocation7], %s59
      %s61 = sshll.u32 [#allocation8], 4
      %s62 = int_to_ptr.vmem [resolvable:$true] %s61
      %67 = dma.hbm_to_vmem [thread:$0]  %s7, 8192, %s62, [#allocation7], 128, 128, 8
    $region33: #{tpu_custom_call.1} parent=1 // pred_fallthru
      _
    // Predicated region
    $region34: #{tpu_custom_call.1} parent=1 // pred_check
      _
    $region35: #{tpu_custom_call.1} parent=1 // pred_check_branch
      %69 = sbr.rel (0) target = $region37
    $region36: #{tpu_custom_call.1} parent=1 // pred_region
      _
    $region37: #{tpu_custom_call.1} parent=1 // pred_fallthru
      _
    // Predicated region
    $region38: #{tpu_custom_call.1} parent=1 // pred_check
      _
    $region39: #{tpu_custom_call.1} parent=1 // pred_check_branch
      %71 = sbr.rel (0) target = $region41
    $region40: #{tpu_custom_call.1} parent=1 // pred_region
      _
    $region41: #{tpu_custom_call.1} parent=1 // pred_fallthru
      _
    // Predicated region
    $region42: #{tpu_custom_call.1} parent=1 // pred_check
      _
    $region43: #{tpu_custom_call.1} parent=1 // pred_check_branch
      %73 = sbr.rel (0) target = $region45
    $region44: #{tpu_custom_call.1} parent=1 // pred_region
      _
    $region45: #{tpu_custom_call.1} parent=1 // pred_fallthru
      _
    // Predicated region
    $region46: #{tpu_custom_call.1} parent=1 // pred_check
      _
    $region47: #{tpu_custom_call.1} parent=1 // pred_check_branch
      %75 = sbr.rel (0) target = $region49
    $region48: #{tpu_custom_call.1} parent=1 // pred_region
      _
    $region49: #{tpu_custom_call.1} parent=1 // pred_fallthru
      _
    // Predicated region
    $region50: #{tpu_custom_call.1} parent=1 // pred_check
      _
    $region51: #{tpu_custom_call.1} parent=1 // pred_check_branch
      %77 = sbr.rel (0) target = $region53
    $region52: #{tpu_custom_call.1} parent=1 // pred_region
      %s79 = ssub.s32 16, 16
      %80 = vsyncadd [#allocation5], %s79
      %s82 = sshll.u32 %s12, 4
      %s83 = int_to_ptr.vmem [resolvable:$true] %s82
      %85 = dma.vmem_to_smem %s83, 16, [#allocation9], [#allocation5]
    $region53: #{tpu_custom_call.1} parent=1 // pred_fallthru
      _
    // Predicated region
    $region54: #{tpu_custom_call.1} parent=1 // pred_check
      _
    $region55: #{tpu_custom_call.1} parent=1 // pred_check_branch
      %87 = sbr.rel (0) target = $region57
    $region56: #{tpu_custom_call.1} parent=1 // pred_region
      %88 = dma.done [#allocation3], 256
    $region57: #{tpu_custom_call.1} parent=1 // pred_fallthru
      _
    // Predicated region
    $region58: #{tpu_custom_call.1} parent=1 // pred_check
      _
    $region59: #{tpu_custom_call.1} parent=1 // pred_check_branch
      %90 = sbr.rel (0) target = $region61
    $region60: #{tpu_custom_call.1} parent=1 // pred_region
      %91 = dma.done [#allocation7], 256
    $region61: #{tpu_custom_call.1} parent=1 // pred_fallthru
      _
    // Predicated region
    $region62: #{tpu_custom_call.1} parent=1 // pred_check
      _
    $region63: #{tpu_custom_call.1} parent=1 // pred_check_branch
      %93 = sbr.rel (0) target = $region65
    $region64: #{tpu_custom_call.1} parent=1 // pred_region
      %94 = dma.done [#allocation7], 8192
    $region65: #{tpu_custom_call.1} parent=1 // pred_fallthru
      _
    // Predicated region
    $region66: #{tpu_custom_call.1} parent=1 // pred_check
      _
    $region67: #{tpu_custom_call.1} parent=1 // pred_check_branch
      %96 = sbr.rel (0) target = $region69
    $region68: #{tpu_custom_call.1} parent=1 // pred_region
      %97 = dma.done [#allocation5], 16
    $region69: #{tpu_custom_call.1} parent=1 // pred_fallthru
      _
    %98 = sfence
    %v102 = vld [vmem:[%s0] sm:$0xf]
    %v103 = vld [vmem:[%s0 + $0x4] sm:$0xf]
    %v104 = vld [vmem:[%s0 + $0x8] sm:$0xf]
    %v105 = vld [vmem:[%s0 + $0xc] sm:$0xf]
    %v106 = vld [vmem:[%s0 + $0x10] sm:$0xf]
    %v107 = vld [vmem:[%s0 + $0x14] sm:$0xf]
    %v108 = vld [vmem:[%s0 + $0x18] sm:$0xf]
    %v109 = vld [vmem:[%s0 + $0x1c] sm:$0xf]
    %v110 = vld [vmem:[%s0 + $0x20] sm:$0xf]
    %v111 = vld [vmem:[%s0 + $0x24] sm:$0xf]
    %v112 = vld [vmem:[%s0 + $0x28] sm:$0xf]
    %v113 = vld [vmem:[%s0 + $0x2c] sm:$0xf]
    %v114 = vld [vmem:[%s0 + $0x30] sm:$0xf]
    %v115 = vld [vmem:[%s0 + $0x34] sm:$0xf]
    %v116 = vld [vmem:[%s0 + $0x38] sm:$0xf]
    %v117 = vld [vmem:[%s0 + $0x3c] sm:$0xf]
    %v118 = vld [vmem:[#allocation2] sm:$0xf]
    %v119 = vld [vmem:[#allocation2 + $0x4] sm:$0xf]
    %v120 = vld [vmem:[#allocation2 + $0x8] sm:$0xf]
    %v121 = vld [vmem:[#allocation2 + $0xc] sm:$0xf]
    %s122 = sld [smem:[#allocation9]]
    %v123 = vstv %s122
    %v140 = vunpack.c.l.b16 %v102
    %v141 = vunpack.c.l.b16 %v103
    %v142 = vunpack.c.l.b16 %v104
    %v143 = vunpack.c.l.b16 %v105
    %v144 = vunpack.c.l.b16 %v106
    %v145 = vunpack.c.l.b16 %v107
    %v146 = vunpack.c.l.b16 %v108
    %v147 = vunpack.c.l.b16 %v109
    %v148 = vunpack.c.l.b16 %v110
    %v149 = vunpack.c.l.b16 %v111
    %v150 = vunpack.c.l.b16 %v112
    %v151 = vunpack.c.l.b16 %v113
    %v152 = vunpack.c.l.b16 %v114
    %v153 = vunpack.c.l.b16 %v115
    %v154 = vunpack.c.l.b16 %v116
    %v155 = vunpack.c.l.b16 %v117
    %v156 = vpack.c.b16 %v141, %v140
    %v157 = vpack.c.b16 %v143, %v142
    %v158 = vpack.c.b16 %v145, %v144
    %v159 = vpack.c.b16 %v147, %v146
    %v160 = vpack.c.b16 %v149, %v148
    %v161 = vpack.c.b16 %v151, %v150
    %v162 = vpack.c.b16 %v153, %v152
    %v163 = vpack.c.b16 %v155, %v154
    %v168 = vunpack.c.l.b16 %v118
    %v169 = vunpack.c.l.b16 %v119
    %v170 = vunpack.c.l.b16 %v120
    %v171 = vunpack.c.l.b16 %v121
    %v172 = vpack.c.b16 %v169, %v168
    %v173 = vpack.c.b16 %v171, %v170
    %vm176 = vcmask 261120
    %v178 = vsel %vm176, %v156, 0
    %v181 = vsel %vm176, %v157, 0
    %v184 = vsel %vm176, %v158, 0
    %v187 = vsel %vm176, %v159, 0
    %v190 = vsel %vm176, %v160, 0
    %v193 = vsel %vm176, %v161, 0
    %v196 = vsel %vm176, %v162, 0
    %v199 = vsel %vm176, %v163, 0
    %201 = vmatprep.subr.bf16.mxu0 0
    %202 = vmatpush1.bf16.msra.mxu0 0
    %203 = vmatprep.subr.bf16.mxu0 0
    %204 = vmatpush1.bf16.msra.mxu0 0
    %205 = vmatprep.subr.bf16.mxu0 0
    %206 = vmatpush1.bf16.msra.mxu0 0
    %207 = vmatprep.subr.bf16.mxu0 0
    %208 = vmatpush1.bf16.msra.mxu0 0
    %209 = vmatprep.subr.bf16.mxu0 0
    %210 = vmatpush1.bf16.msra.mxu0 0
    %211 = vmatprep.subr.bf16.mxu0 0
    %212 = vmatpush1.bf16.msra.mxu0 0
    %213 = vmatprep.subr.bf16.mxu0 0
    %214 = vmatpush1.bf16.msra.mxu0 %v173
    %215 = vmatprep.subr.bf16.mxu0 0
    %216 = vmatpush1.bf16.msra.mxu0 %v172
    %217 = vmatprep.subr.bf16.mxu0 0
    %218 = vmatpush2.bf16.msra.mxu0 0
    %219 = vmatprep.subr.bf16.mxu0 0
    %220 = vmatpush2.bf16.msra.mxu0 0
    %221 = vmatprep.subr.bf16.mxu0 0
    %222 = vmatpush2.bf16.msra.mxu0 0
    %223 = vmatprep.subr.bf16.mxu0 0
    %224 = vmatpush2.bf16.msra.mxu0 0
    %225 = vmatprep.subr.bf16.mxu0 0
    %226 = vmatpush2.bf16.msra.mxu0 0
    %227 = vmatprep.subr.bf16.mxu0 0
    %228 = vmatpush2.bf16.msra.mxu0 0
    %229 = vmatprep.subr.bf16.mxu0 0
    %230 = vmatpush2.bf16.msra.mxu0 0
    %231 = vmatprep.subr.bf16.mxu0 0
    %232 = vmatpush2.bf16.msra.mxu0 0
    %233 = vmatprep.mubr.bf16.mxu0 0
    %234 = vmatmul.mubr.bf16.gmra.mxu0 %v178
    %v235 = vpop.f32.mrf.mxu0
    %v236 = vadd.f32 %v123, %v235
    %v237 = vpop.f32.mrf.mxu0
    %v238 = vpop.f32.mrf.mxu0
    %v239 = vadd.f32 %v123, %v238
    %v240 = vpop.f32.mrf.mxu0
    %241 = vmatprep.mubr.bf16.mxu0 0
    %242 = vmatmul.mubr.bf16.gmra.mxu0 %v181
    %v243 = vpop.f32.mrf.mxu0
    %v244 = vadd.f32 %v123, %v243
    %v245 = vpop.f32.mrf.mxu0
    %v246 = vpop.f32.mrf.mxu0
    %v247 = vadd.f32 %v123, %v246
    %v248 = vpop.f32.mrf.mxu0
    %249 = vmatprep.mubr.bf16.mxu0 0
    %250 = vmatmul.mubr.bf16.gmra.mxu0 %v184
    %v251 = vpop.f32.mrf.mxu0
    %v252 = vadd.f32 %v123, %v251
    %v253 = vpop.f32.mrf.mxu0
    %v254 = vpop.f32.mrf.mxu0
    %v255 = vadd.f32 %v123, %v254
    %v256 = vpop.f32.mrf.mxu0
    %257 = vmatprep.mubr.bf16.mxu0 0
    %258 = vmatmul.mubr.bf16.gmra.mxu0 %v187
    %v259 = vpop.f32.mrf.mxu0
    %v260 = vadd.f32 %v123, %v259
    %v261 = vpop.f32.mrf.mxu0
    %v262 = vpop.f32.mrf.mxu0
    %v263 = vadd.f32 %v123, %v262
    %v264 = vpop.f32.mrf.mxu0
    %265 = vmatprep.mubr.bf16.mxu0 0
    %266 = vmatmul.mubr.bf16.gmra.mxu0 %v190
    %v267 = vpop.f32.mrf.mxu0
    %v268 = vadd.f32 %v123, %v267
    %v269 = vpop.f32.mrf.mxu0
    %v270 = vpop.f32.mrf.mxu0
    %v271 = vadd.f32 %v123, %v270
    %v272 = vpop.f32.mrf.mxu0
    %273 = vmatprep.mubr.bf16.mxu0 0
    %274 = vmatmul.mubr.bf16.gmra.mxu0 %v193
    %v275 = vpop.f32.mrf.mxu0
    %v276 = vadd.f32 %v123, %v275
    %v277 = vpop.f32.mrf.mxu0
    %v278 = vpop.f32.mrf.mxu0
    %v279 = vadd.f32 %v123, %v278
    %v280 = vpop.f32.mrf.mxu0
    %281 = vmatprep.mubr.bf16.mxu0 0
    %282 = vmatmul.mubr.bf16.gmra.mxu0 %v196
    %v283 = vpop.f32.mrf.mxu0
    %v284 = vadd.f32 %v123, %v283
    %v285 = vpop.f32.mrf.mxu0
    %v286 = vpop.f32.mrf.mxu0
    %v287 = vadd.f32 %v123, %v286
    %v288 = vpop.f32.mrf.mxu0
    %289 = vmatprep.mubr.bf16.mxu0 0
    %290 = vmatmul.mubr.bf16.gmra.mxu0 %v199
    %v291 = vpop.f32.mrf.mxu0
    %v292 = vadd.f32 %v123, %v291
    %v293 = vpop.f32.mrf.mxu0
    %v294 = vpop.f32.mrf.mxu0
    %v295 = vadd.f32 %v123, %v294
    %v296 = vpop.f32.mrf.mxu0
    %297 = vdwg.mxu0
    %v298 = vld [vmem:[%s1] sm:$0xf]
    %v299 = vld [vmem:[%s1 + $0x4] sm:$0xf]
    %v300 = vld [vmem:[%s1 + $0x8] sm:$0xf]
    %v301 = vld [vmem:[%s1 + $0xc] sm:$0xf]
    %v302 = vld [vmem:[%s1 + $0x10] sm:$0xf]
    %v303 = vld [vmem:[%s1 + $0x14] sm:$0xf]
    %v304 = vld [vmem:[%s1 + $0x18] sm:$0xf]
    %v305 = vld [vmem:[%s1 + $0x1c] sm:$0xf]
    %v306 = vld [vmem:[%s1 + $0x20] sm:$0xf]
    %v307 = vld [vmem:[%s1 + $0x24] sm:$0xf]
    %v308 = vld [vmem:[%s1 + $0x28] sm:$0xf]
    %v309 = vld [vmem:[%s1 + $0x2c] sm:$0xf]
    %v310 = vld [vmem:[%s1 + $0x30] sm:$0xf]
    %v311 = vld [vmem:[%s1 + $0x34] sm:$0xf]
    %v312 = vld [vmem:[%s1 + $0x38] sm:$0xf]
    %v313 = vld [vmem:[%s1 + $0x3c] sm:$0xf]
    %v314 = vld [vmem:[#allocation6] sm:$0xf]
    %v315 = vld [vmem:[#allocation6 + $0x4] sm:$0xf]
    %v316 = vld [vmem:[#allocation6 + $0x8] sm:$0xf]
    %v317 = vld [vmem:[#allocation6 + $0xc] sm:$0xf]
    %s318 = sld [smem:[#allocation9 + $0x1]]
    %v319 = vstv %s318
    %v336 = vunpack.c.l.b16 %v298
    %v337 = vunpack.c.l.b16 %v299
    %v338 = vunpack.c.l.b16 %v300
    %v339 = vunpack.c.l.b16 %v301
    %v340 = vunpack.c.l.b16 %v302
    %v341 = vunpack.c.l.b16 %v303
    %v342 = vunpack.c.l.b16 %v304
    %v343 = vunpack.c.l.b16 %v305
    %v344 = vunpack.c.l.b16 %v306
    %v345 = vunpack.c.l.b16 %v307
    %v346 = vunpack.c.l.b16 %v308
    %v347 = vunpack.c.l.b16 %v309
    %v348 = vunpack.c.l.b16 %v310
    %v349 = vunpack.c.l.b16 %v311
    %v350 = vunpack.c.l.b16 %v312
    %v351 = vunpack.c.l.b16 %v313
    %v352 = vpack.c.b16 %v337, %v336
    %v353 = vpack.c.b16 %v339, %v338
    %v354 = vpack.c.b16 %v341, %v340
    %v355 = vpack.c.b16 %v343, %v342
    %v356 = vpack.c.b16 %v345, %v344
    %v357 = vpack.c.b16 %v347, %v346
    %v358 = vpack.c.b16 %v349, %v348
    %v359 = vpack.c.b16 %v351, %v350
    %v364 = vunpack.c.l.b16 %v314
    %v365 = vunpack.c.l.b16 %v315
    %v366 = vunpack.c.l.b16 %v316
    %v367 = vunpack.c.l.b16 %v317
    %v368 = vpack.c.b16 %v365, %v364
    %v369 = vpack.c.b16 %v367, %v366
    %v373 = vsel %vm176, %v352, 0
    %v376 = vsel %vm176, %v353, 0
    %v379 = vsel %vm176, %v354, 0
    %v382 = vsel %vm176, %v355, 0
    %v385 = vsel %vm176, %v356, 0
    %v388 = vsel %vm176, %v357, 0
    %v391 = vsel %vm176, %v358, 0
    %v394 = vsel %vm176, %v359, 0
    %396 = vmatprep.subr.bf16.mxu0 0
    %397 = vmatpush1.bf16.msra.mxu0 0
    %398 = vmatprep.subr.bf16.mxu0 0
    %399 = vmatpush1.bf16.msra.mxu0 0
    %400 = vmatprep.subr.bf16.mxu0 0
    %401 = vmatpush1.bf16.msra.mxu0 0
    %402 = vmatprep.subr.bf16.mxu0 0
    %403 = vmatpush1.bf16.msra.mxu0 0
    %404 = vmatprep.subr.bf16.mxu0 0
    %405 = vmatpush1.bf16.msra.mxu0 0
    %406 = vmatprep.subr.bf16.mxu0 0
    %407 = vmatpush1.bf16.msra.mxu0 0
    %408 = vmatprep.subr.bf16.mxu0 0
    %409 = vmatpush1.bf16.msra.mxu0 %v369
    %410 = vmatprep.subr.bf16.mxu0 0
    %411 = vmatpush1.bf16.msra.mxu0 %v368
    %412 = vmatprep.subr.bf16.mxu0 0
    %413 = vmatpush2.bf16.msra.mxu0 0
    %414 = vmatprep.subr.bf16.mxu0 0
    %415 = vmatpush2.bf16.msra.mxu0 0
    %416 = vmatprep.subr.bf16.mxu0 0
    %417 = vmatpush2.bf16.msra.mxu0 0
    %418 = vmatprep.subr.bf16.mxu0 0
    %419 = vmatpush2.bf16.msra.mxu0 0
    %420 = vmatprep.subr.bf16.mxu0 0
    %421 = vmatpush2.bf16.msra.mxu0 0
    %422 = vmatprep.subr.bf16.mxu0 0
    %423 = vmatpush2.bf16.msra.mxu0 0
    %424 = vmatprep.subr.bf16.mxu0 0
    %425 = vmatpush2.bf16.msra.mxu0 0
    %426 = vmatprep.subr.bf16.mxu0 0
    %427 = vmatpush2.bf16.msra.mxu0 0
    %428 = vmatprep.mubr.bf16.mxu0 0
    %429 = vmatmul.mubr.bf16.gmra.mxu0 %v373
    %v430 = vpop.f32.mrf.mxu0
    %v431 = vadd.f32 %v319, %v430
    %v432 = vpop.f32.mrf.mxu0
    %v433 = vpop.f32.mrf.mxu0
    %v434 = vadd.f32 %v319, %v433
    %v435 = vpop.f32.mrf.mxu0
    %436 = vmatprep.mubr.bf16.mxu0 0
    %437 = vmatmul.mubr.bf16.gmra.mxu0 %v376
    %v438 = vpop.f32.mrf.mxu0
    %v439 = vadd.f32 %v319, %v438
    %v440 = vpop.f32.mrf.mxu0
    %v441 = vpop.f32.mrf.mxu0
    %v442 = vadd.f32 %v319, %v441
    %v443 = vpop.f32.mrf.mxu0
    %444 = vmatprep.mubr.bf16.mxu0 0
    %445 = vmatmul.mubr.bf16.gmra.mxu0 %v379
    %v446 = vpop.f32.mrf.mxu0
    %v447 = vadd.f32 %v319, %v446
    %v448 = vpop.f32.mrf.mxu0
    %v449 = vpop.f32.mrf.mxu0
    %v450 = vadd.f32 %v319, %v449
    %v451 = vpop.f32.mrf.mxu0
    %452 = vmatprep.mubr.bf16.mxu0 0
    %453 = vmatmul.mubr.bf16.gmra.mxu0 %v382
    %v454 = vpop.f32.mrf.mxu0
    %v455 = vadd.f32 %v319, %v454
    %v456 = vpop.f32.mrf.mxu0
    %v457 = vpop.f32.mrf.mxu0
    %v458 = vadd.f32 %v319, %v457
    %v459 = vpop.f32.mrf.mxu0
    %460 = vmatprep.mubr.bf16.mxu0 0
    %461 = vmatmul.mubr.bf16.gmra.mxu0 %v385
    %v462 = vpop.f32.mrf.mxu0
    %v463 = vadd.f32 %v319, %v462
    %v464 = vpop.f32.mrf.mxu0
    %v465 = vpop.f32.mrf.mxu0
    %v466 = vadd.f32 %v319, %v465
    %v467 = vpop.f32.mrf.mxu0
    %468 = vmatprep.mubr.bf16.mxu0 0
    %469 = vmatmul.mubr.bf16.gmra.mxu0 %v388
    %v470 = vpop.f32.mrf.mxu0
    %v471 = vadd.f32 %v319, %v470
    %v472 = vpop.f32.mrf.mxu0
    %v473 = vpop.f32.mrf.mxu0
    %v474 = vadd.f32 %v319, %v473
    %v475 = vpop.f32.mrf.mxu0
    %476 = vmatprep.mubr.bf16.mxu0 0
    %477 = vmatmul.mubr.bf16.gmra.mxu0 %v391
    %v478 = vpop.f32.mrf.mxu0
    %v479 = vadd.f32 %v319, %v478
    %v480 = vpop.f32.mrf.mxu0
    %v481 = vpop.f32.mrf.mxu0
    %v482 = vadd.f32 %v319, %v481
    %v483 = vpop.f32.mrf.mxu0
    %484 = vmatprep.mubr.bf16.mxu0 0
    %485 = vmatmul.mubr.bf16.gmra.mxu0 %v394
    %v486 = vpop.f32.mrf.mxu0
    %v487 = vadd.f32 %v319, %v486
    %v488 = vpop.f32.mrf.mxu0
    %v489 = vpop.f32.mrf.mxu0
    %v490 = vadd.f32 %v319, %v489
    %v491 = vpop.f32.mrf.mxu0
    %492 = vdwg.mxu0
    %v493 = vpack.c.bf16 %v239, %v236
    %v494 = vpack.c.bf16 %v247, %v244
    %v495 = vpack.c.bf16 %v255, %v252
    %v496 = vpack.c.bf16 %v263, %v260
    %v497 = vpack.c.bf16 %v271, %v268
    %v498 = vpack.c.bf16 %v279, %v276
    %v499 = vpack.c.bf16 %v287, %v284
    %v500 = vpack.c.bf16 %v295, %v292
    %v501 = vmul.bf16 %v493, 1056980736
    %v502 = vmul.bf16 %v494, 1056980736
    %v503 = vmul.bf16 %v495, 1056980736
    %v504 = vmul.bf16 %v496, 1056980736
    %v505 = vmul.bf16 %v497, 1056980736
    %v506 = vmul.bf16 %v498, 1056980736
    %v507 = vmul.bf16 %v499, 1056980736
    %v508 = vmul.bf16 %v500, 1056980736
    %v509 = vtanh.bf16.pop %v501
    %v510 = vtanh.bf16.pop %v502
    %v511 = vtanh.bf16.pop %v503
    %v512 = vtanh.bf16.pop %v504
    %v513 = vtanh.bf16.pop %v505
    %v514 = vtanh.bf16.pop %v506
    %v515 = vtanh.bf16.pop %v507
    %v516 = vtanh.bf16.pop %v508
    %v517 = vadd.bf16 %v509, 1065369472
    %v518 = vadd.bf16 %v510, 1065369472
    %v519 = vadd.bf16 %v511, 1065369472
    %v520 = vadd.bf16 %v512, 1065369472
    %v521 = vadd.bf16 %v513, 1065369472
    %v522 = vadd.bf16 %v514, 1065369472
    %v523 = vadd.bf16 %v515, 1065369472
    %v524 = vadd.bf16 %v516, 1065369472
    %v525 = vmul.bf16 %v517, 1056980736
    %v526 = vmul.bf16 %v518, 1056980736
    %v527 = vmul.bf16 %v519, 1056980736
    %v528 = vmul.bf16 %v520, 1056980736
    %v529 = vmul.bf16 %v521, 1056980736
    %v530 = vmul.bf16 %v522, 1056980736
    %v531 = vmul.bf16 %v523, 1056980736
    %v532 = vmul.bf16 %v524, 1056980736
    %v533 = vpack.c.bf16 %v434, %v431
    %v534 = vpack.c.bf16 %v442, %v439
    %v535 = vpack.c.bf16 %v450, %v447
    %v536 = vpack.c.bf16 %v458, %v455
    %v537 = vpack.c.bf16 %v466, %v463
    %v538 = vpack.c.bf16 %v474, %v471
    %v539 = vpack.c.bf16 %v482, %v479
    %v540 = vpack.c.bf16 %v490, %v487
    %v541 = vmul.bf16 %v533, 1056980736
    %v542 = vmul.bf16 %v534, 1056980736
    %v543 = vmul.bf16 %v535, 1056980736
    %v544 = vmul.bf16 %v536, 1056980736
    %v545 = vmul.bf16 %v537, 1056980736
    %v546 = vmul.bf16 %v538, 1056980736
    %v547 = vmul.bf16 %v539, 1056980736
    %v548 = vmul.bf16 %v540, 1056980736
    %v549 = vtanh.bf16.pop %v541
    %v550 = vtanh.bf16.pop %v542
    %v551 = vtanh.bf16.pop %v543
    %v552 = vtanh.bf16.pop %v544
    %v553 = vtanh.bf16.pop %v545
    %v554 = vtanh.bf16.pop %v546
    %v555 = vtanh.bf16.pop %v547
    %v556 = vtanh.bf16.pop %v548
    %v557 = vadd.bf16 %v549, 1065369472
    %v558 = vadd.bf16 %v550, 1065369472
    %v559 = vadd.bf16 %v551, 1065369472
    %v560 = vadd.bf16 %v552, 1065369472
    %v561 = vadd.bf16 %v553, 1065369472
    %v562 = vadd.bf16 %v554, 1065369472
    %v563 = vadd.bf16 %v555, 1065369472
    %v564 = vadd.bf16 %v556, 1065369472
    %v565 = vmul.bf16 %v557, 1056980736
    %v566 = vmul.bf16 %v558, 1056980736
    %v567 = vmul.bf16 %v559, 1056980736
    %v568 = vmul.bf16 %v560, 1056980736
    %v569 = vmul.bf16 %v561, 1056980736
    %v570 = vmul.bf16 %v562, 1056980736
    %v571 = vmul.bf16 %v563, 1056980736
    %v572 = vmul.bf16 %v564, 1056980736
    %v573 = vld [vmem:[%s2] sm:$0xf]
    %v574 = vld [vmem:[%s2 + $0x4] sm:$0xf]
    %v575 = vld [vmem:[%s2 + $0x8] sm:$0xf]
    %v576 = vld [vmem:[%s2 + $0xc] sm:$0xf]
    %v577 = vld [vmem:[%s2 + $0x10] sm:$0xf]
    %v578 = vld [vmem:[%s2 + $0x14] sm:$0xf]
    %v579 = vld [vmem:[%s2 + $0x18] sm:$0xf]
    %v580 = vld [vmem:[%s2 + $0x1c] sm:$0xf]
    %v581 = vld [vmem:[%s2 + $0x20] sm:$0xf]
    %v582 = vld [vmem:[%s2 + $0x24] sm:$0xf]
    %v583 = vld [vmem:[%s2 + $0x28] sm:$0xf]
    %v584 = vld [vmem:[%s2 + $0x2c] sm:$0xf]
    %v585 = vld [vmem:[%s2 + $0x30] sm:$0xf]
    %v586 = vld [vmem:[%s2 + $0x34] sm:$0xf]
    %v587 = vld [vmem:[%s2 + $0x38] sm:$0xf]
    %v588 = vld [vmem:[%s2 + $0x3c] sm:$0xf]
    %v589 = vsub.bf16 %v525, %v565
    %v590 = vsub.bf16 %v526, %v566
    %v591 = vsub.bf16 %v527, %v567
    %v592 = vsub.bf16 %v528, %v568
    %v593 = vsub.bf16 %v529, %v569
    %v594 = vsub.bf16 %v530, %v570
    %v595 = vsub.bf16 %v531, %v571
    %v596 = vsub.bf16 %v532, %v572
    %v605 = vunpack.c.l.b16 %v589
    %v606 = vunpack.c.h.b16 %v589
    %v607 = vunpack.c.l.b16 %v590
    %v608 = vunpack.c.h.b16 %v590
    %v609 = vunpack.c.l.b16 %v591
    %v610 = vunpack.c.h.b16 %v591
    %v611 = vunpack.c.l.b16 %v592
    %v612 = vunpack.c.h.b16 %v592
    %v613 = vunpack.c.l.b16 %v593
    %v614 = vunpack.c.h.b16 %v593
    %v615 = vunpack.c.l.b16 %v594
    %v616 = vunpack.c.h.b16 %v594
    %v617 = vunpack.c.l.b16 %v595
    %v618 = vunpack.c.h.b16 %v595
    %v619 = vunpack.c.l.b16 %v596
    %v620 = vunpack.c.h.b16 %v596
    %v621 = vpack.c.b16 %v605, %v605
    %v622 = vpack.c.b16 %v606, %v606
    %v623 = vpack.c.b16 %v607, %v607
    %v624 = vpack.c.b16 %v608, %v608
    %v625 = vpack.c.b16 %v609, %v609
    %v626 = vpack.c.b16 %v610, %v610
    %v627 = vpack.c.b16 %v611, %v611
    %v628 = vpack.c.b16 %v612, %v612
    %v629 = vpack.c.b16 %v613, %v613
    %v630 = vpack.c.b16 %v614, %v614
    %v631 = vpack.c.b16 %v615, %v615
    %v632 = vpack.c.b16 %v616, %v616
    %v633 = vpack.c.b16 %v617, %v617
    %v634 = vpack.c.b16 %v618, %v618
    %v635 = vpack.c.b16 %v619, %v619
    %v636 = vpack.c.b16 %v620, %v620
    %v653 = vmul.bf16 %v573, %v621
    %v654 = vmul.bf16 %v574, %v622
    %v655 = vmul.bf16 %v575, %v623
    %v656 = vmul.bf16 %v576, %v624
    %v657 = vmul.bf16 %v577, %v625
    %v658 = vmul.bf16 %v578, %v626
    %v659 = vmul.bf16 %v579, %v627
    %v660 = vmul.bf16 %v580, %v628
    %v661 = vmul.bf16 %v581, %v629
    %v662 = vmul.bf16 %v582, %v630
    %v663 = vmul.bf16 %v583, %v631
    %v664 = vmul.bf16 %v584, %v632
    %v665 = vmul.bf16 %v585, %v633
    %v666 = vmul.bf16 %v586, %v634
    %v667 = vmul.bf16 %v587, %v635
    %v668 = vmul.bf16 %v588, %v636
    %v669 = vld [vmem:[%s5] sm:$0xff]
    %v670 = vld [vmem:[%s5 + $0x8] sm:$0xff]
    %v671 = vld [vmem:[%s5 + $0x10] sm:$0xff]
    %v672 = vld [vmem:[%s5 + $0x18] sm:$0xff]
    %v673 = vld [vmem:[%s5 + $0x20] sm:$0xff]
    %v674 = vld [vmem:[%s5 + $0x28] sm:$0xff]
    %v675 = vld [vmem:[%s5 + $0x30] sm:$0xff]
    %v676 = vld [vmem:[%s5 + $0x38] sm:$0xff]
    %v677 = vld [vmem:[%s5 + $0x40] sm:$0xff]
    %v678 = vld [vmem:[%s5 + $0x48] sm:$0xff]
    %v679 = vld [vmem:[%s5 + $0x50] sm:$0xff]
    %v680 = vld [vmem:[%s5 + $0x58] sm:$0xff]
    %v681 = vld [vmem:[%s5 + $0x60] sm:$0xff]
    %v682 = vld [vmem:[%s5 + $0x68] sm:$0xff]
    %v683 = vld [vmem:[%s5 + $0x70] sm:$0xff]
    %v684 = vld [vmem:[%s5 + $0x78] sm:$0xff]
    %v685 = vld [vmem:[%s6] sm:$0xf]
    %v687 = vlaneseq
    %v688 = vshrl.u32 %v687, 7
    %v689 = vsub.s32 0, %v688
    %v690 = vrot.slane %v685, %v689
    %v691 = vlaneseq
    %v692 = vshrl.u32 %v691, 7
    %v693 = vsub.s32 1, %v692
    %v694 = vrot.slane %v685, %v693
    %v695 = vlaneseq
    %v696 = vshrl.u32 %v695, 7
    %v697 = vsub.s32 2, %v696
    %v698 = vrot.slane %v685, %v697
    %v699 = vlaneseq
    %v700 = vshrl.u32 %v699, 7
    %v701 = vsub.s32 3, %v700
    %v702 = vrot.slane %v685, %v701
    %v723 = vunpack.c.l.b16 %v653
    %v724 = vunpack.c.l.b16 %v654
    %v725 = vunpack.c.l.b16 %v655
    %v726 = vunpack.c.l.b16 %v656
    %v727 = vunpack.c.l.b16 %v657
    %v728 = vunpack.c.l.b16 %v658
    %v729 = vunpack.c.l.b16 %v659
    %v730 = vunpack.c.l.b16 %v660
    %v731 = vunpack.c.l.b16 %v661
    %v732 = vunpack.c.l.b16 %v662
    %v733 = vunpack.c.l.b16 %v663
    %v734 = vunpack.c.l.b16 %v664
    %v735 = vunpack.c.l.b16 %v665
    %v736 = vunpack.c.l.b16 %v666
    %v737 = vunpack.c.l.b16 %v667
    %v738 = vunpack.c.l.b16 %v668
    %v739 = vpack.c.b16 %v724, %v723
    %v740 = vpack.c.b16 %v726, %v725
    %v741 = vpack.c.b16 %v728, %v727
    %v742 = vpack.c.b16 %v730, %v729
    %v743 = vpack.c.b16 %v732, %v731
    %v744 = vpack.c.b16 %v734, %v733
    %v745 = vpack.c.b16 %v736, %v735
    %v746 = vpack.c.b16 %v738, %v737
    %v763 = vunpack.c.l.b16 %v669
    %v764 = vunpack.c.h.b16 %v669
    %v765 = vunpack.c.l.b16 %v670
    %v766 = vunpack.c.h.b16 %v670
    %v767 = vunpack.c.l.b16 %v671
    %v768 = vunpack.c.h.b16 %v671
    %v769 = vunpack.c.l.b16 %v672
    %v770 = vunpack.c.h.b16 %v672
    %v771 = vunpack.c.l.b16 %v673
    %v772 = vunpack.c.h.b16 %v673
    %v773 = vunpack.c.l.b16 %v674
    %v774 = vunpack.c.h.b16 %v674
    %v775 = vunpack.c.l.b16 %v675
    %v776 = vunpack.c.h.b16 %v675
    %v777 = vunpack.c.l.b16 %v676
    %v778 = vunpack.c.h.b16 %v676
    %v779 = vunpack.c.l.b16 %v677
    %v780 = vunpack.c.h.b16 %v677
    %v781 = vunpack.c.l.b16 %v678
    %v782 = vunpack.c.h.b16 %v678
    %v783 = vunpack.c.l.b16 %v679
    %v784 = vunpack.c.h.b16 %v679
    %v785 = vunpack.c.l.b16 %v680
    %v786 = vunpack.c.h.b16 %v680
    %v787 = vunpack.c.l.b16 %v681
    %v788 = vunpack.c.h.b16 %v681
    %v789 = vunpack.c.l.b16 %v682
    %v790 = vunpack.c.h.b16 %v682
    %v791 = vunpack.c.l.b16 %v683
    %v792 = vunpack.c.h.b16 %v683
    %v793 = vunpack.c.l.b16 %v684
    %v794 = vunpack.c.h.b16 %v684
    %v795 = vpack.c.b16 %v767, %v763
    %v796 = vpack.c.b16 %v768, %v764
    %v797 = vpack.c.b16 %v769, %v765
    %v798 = vpack.c.b16 %v770, %v766
    %v799 = vpack.c.b16 %v775, %v771
    %v800 = vpack.c.b16 %v776, %v772
    %v801 = vpack.c.b16 %v777, %v773
    %v802 = vpack.c.b16 %v778, %v774
    %v803 = vpack.c.b16 %v783, %v779
    %v804 = vpack.c.b16 %v784, %v780
    %v805 = vpack.c.b16 %v785, %v781
    %v806 = vpack.c.b16 %v786, %v782
    %v807 = vpack.c.b16 %v791, %v787
    %v808 = vpack.c.b16 %v792, %v788
    %v809 = vpack.c.b16 %v793, %v789
    %v810 = vpack.c.b16 %v794, %v790
    %vm827 = vcmask 523264
    %v829 = vsel %vm827, %v739, 0
    %v832 = vsel %vm827, %v740, 0
    %v835 = vsel %vm827, %v741, 0
    %v838 = vsel %vm827, %v742, 0
    %v841 = vsel %vm827, %v743, 0
    %v844 = vsel %vm827, %v744, 0
    %v847 = vsel %vm827, %v745, 0
    %v850 = vsel %vm827, %v746, 0
    %852 = vmatprep.subr.bf16.mxu0 0
    %853 = vmatpush1.bf16.msra.mxu0 0
    %854 = vmatprep.subr.bf16.mxu0 0
    %855 = vmatpush1.bf16.msra.mxu0 0
    %856 = vmatprep.subr.bf16.mxu0 0
    %857 = vmatpush1.bf16.msra.mxu0 0
    %858 = vmatprep.subr.bf16.mxu0 0
    %859 = vmatpush1.bf16.msra.mxu0 0
    %860 = vmatprep.subr.bf16.mxu0 %v808
    %861 = vmatpush1.bf16.msra.mxu0 %v807
    %862 = vmatprep.subr.bf16.mxu0 %v804
    %863 = vmatpush1.bf16.msra.mxu0 %v803
    %864 = vmatprep.subr.bf16.mxu0 %v800
    %865 = vmatpush1.bf16.msra.mxu0 %v799
    %866 = vmatprep.subr.bf16.mxu0 %v796
    %867 = vmatpush1.bf16.msra.mxu0 %v795
    %868 = vmatprep.subr.bf16.mxu0 0
    %869 = vmatpush2.bf16.msra.mxu0 0
    %870 = vmatprep.subr.bf16.mxu0 0
    %871 = vmatpush2.bf16.msra.mxu0 0
    %872 = vmatprep.subr.bf16.mxu0 0
    %873 = vmatpush2.bf16.msra.mxu0 0
    %874 = vmatprep.subr.bf16.mxu0 0
    %875 = vmatpush2.bf16.msra.mxu0 0
    %876 = vmatprep.subr.bf16.mxu0 0
    %877 = vmatpush2.bf16.msra.mxu0 0
    %878 = vmatprep.subr.bf16.mxu0 0
    %879 = vmatpush2.bf16.msra.mxu0 0
    %880 = vmatprep.subr.bf16.mxu0 0
    %881 = vmatpush2.bf16.msra.mxu0 0
    %882 = vmatprep.subr.bf16.mxu0 0
    %883 = vmatpush2.bf16.msra.mxu0 0
    %884 = vmatprep.mubr.bf16.mxu0 0
    %885 = vmatmul.mubr.bf16.gmra.mxu0 %v829
    %v886 = vpop.f32.mrf.mxu0
    %v887 = vadd.f32 %v690, %v886
    %v888 = vpop.f32.mrf.mxu0
    %v889 = vadd.f32 %v694, %v888
    %v890 = vpop.f32.mrf.mxu0
    %v891 = vadd.f32 %v690, %v890
    %v892 = vpop.f32.mrf.mxu0
    %v893 = vadd.f32 %v694, %v892
    %894 = vmatprep.mubr.bf16.mxu0 0
    %895 = vmatmul.mubr.bf16.gmra.mxu0 %v832
    %v896 = vpop.f32.mrf.mxu0
    %v897 = vadd.f32 %v690, %v896
    %v898 = vpop.f32.mrf.mxu0
    %v899 = vadd.f32 %v694, %v898
    %v900 = vpop.f32.mrf.mxu0
    %v901 = vadd.f32 %v690, %v900
    %v902 = vpop.f32.mrf.mxu0
    %v903 = vadd.f32 %v694, %v902
    %904 = vmatprep.mubr.bf16.mxu0 0
    %905 = vmatmul.mubr.bf16.gmra.mxu0 %v835
    %v906 = vpop.f32.mrf.mxu0
    %v907 = vadd.f32 %v690, %v906
    %v908 = vpop.f32.mrf.mxu0
    %v909 = vadd.f32 %v694, %v908
    %v910 = vpop.f32.mrf.mxu0
    %v911 = vadd.f32 %v690, %v910
    %v912 = vpop.f32.mrf.mxu0
    %v913 = vadd.f32 %v694, %v912
    %914 = vmatprep.mubr.bf16.mxu0 0
    %915 = vmatmul.mubr.bf16.gmra.mxu0 %v838
    %v916 = vpop.f32.mrf.mxu0
    %v917 = vadd.f32 %v690, %v916
    %v918 = vpop.f32.mrf.mxu0
    %v919 = vadd.f32 %v694, %v918
    %v920 = vpop.f32.mrf.mxu0
    %v921 = vadd.f32 %v690, %v920
    %v922 = vpop.f32.mrf.mxu0
    %v923 = vadd.f32 %v694, %v922
    %924 = vmatprep.mubr.bf16.mxu0 0
    %925 = vmatmul.mubr.bf16.gmra.mxu0 %v841
    %v926 = vpop.f32.mrf.mxu0
    %v927 = vadd.f32 %v690, %v926
    %v928 = vpop.f32.mrf.mxu0
    %v929 = vadd.f32 %v694, %v928
    %v930 = vpop.f32.mrf.mxu0
    %v931 = vadd.f32 %v690, %v930
    %v932 = vpop.f32.mrf.mxu0
    %v933 = vadd.f32 %v694, %v932
    %934 = vmatprep.mubr.bf16.mxu0 0
    %935 = vmatmul.mubr.bf16.gmra.mxu0 %v844
    %v936 = vpop.f32.mrf.mxu0
    %v937 = vadd.f32 %v690, %v936
    %v938 = vpop.f32.mrf.mxu0
    %v939 = vadd.f32 %v694, %v938
    %v940 = vpop.f32.mrf.mxu0
    %v941 = vadd.f32 %v690, %v940
    %v942 = vpop.f32.mrf.mxu0
    %v943 = vadd.f32 %v694, %v942
    %944 = vmatprep.mubr.bf16.mxu0 0
    %945 = vmatmul.mubr.bf16.gmra.mxu0 %v847
    %v946 = vpop.f32.mrf.mxu0
    %v947 = vadd.f32 %v690, %v946
    %v948 = vpop.f32.mrf.mxu0
    %v949 = vadd.f32 %v694, %v948
    %v950 = vpop.f32.mrf.mxu0
    %v951 = vadd.f32 %v690, %v950
    %v952 = vpop.f32.mrf.mxu0
    %v953 = vadd.f32 %v694, %v952
    %954 = vmatprep.mubr.bf16.mxu0 0
    %955 = vmatmul.mubr.bf16.gmra.mxu0 %v850
    %v956 = vpop.f32.mrf.mxu0
    %v957 = vadd.f32 %v690, %v956
    %v958 = vpop.f32.mrf.mxu0
    %v959 = vadd.f32 %v694, %v958
    %v960 = vpop.f32.mrf.mxu0
    %v961 = vadd.f32 %v690, %v960
    %v962 = vpop.f32.mrf.mxu0
    %v963 = vadd.f32 %v694, %v962
    %964 = vdwg.mxu0
    %965 = vmatprep.subr.bf16.mxu0 0
    %966 = vmatpush1.bf16.msra.mxu0 0
    %967 = vmatprep.subr.bf16.mxu0 0
    %968 = vmatpush1.bf16.msra.mxu0 0
    %969 = vmatprep.subr.bf16.mxu0 0
    %970 = vmatpush1.bf16.msra.mxu0 0
    %971 = vmatprep.subr.bf16.mxu0 0
    %972 = vmatpush1.bf16.msra.mxu0 0
    %973 = vmatprep.subr.bf16.mxu0 %v810
    %974 = vmatpush1.bf16.msra.mxu0 %v809
    %975 = vmatprep.subr.bf16.mxu0 %v806
    %976 = vmatpush1.bf16.msra.mxu0 %v805
    %977 = vmatprep.subr.bf16.mxu0 %v802
    %978 = vmatpush1.bf16.msra.mxu0 %v801
    %979 = vmatprep.subr.bf16.mxu0 %v798
    %980 = vmatpush1.bf16.msra.mxu0 %v797
    %981 = vmatprep.subr.bf16.mxu0 0
    %982 = vmatpush2.bf16.msra.mxu0 0
    %983 = vmatprep.subr.bf16.mxu0 0
    %984 = vmatpush2.bf16.msra.mxu0 0
    %985 = vmatprep.subr.bf16.mxu0 0
    %986 = vmatpush2.bf16.msra.mxu0 0
    %987 = vmatprep.subr.bf16.mxu0 0
    %988 = vmatpush2.bf16.msra.mxu0 0
    %989 = vmatprep.subr.bf16.mxu0 0
    %990 = vmatpush2.bf16.msra.mxu0 0
    %991 = vmatprep.subr.bf16.mxu0 0
    %992 = vmatpush2.bf16.msra.mxu0 0
    %993 = vmatprep.subr.bf16.mxu0 0
    %994 = vmatpush2.bf16.msra.mxu0 0
    %995 = vmatprep.subr.bf16.mxu0 0
    %996 = vmatpush2.bf16.msra.mxu0 0
    %997 = vmatprep.mubr.bf16.mxu0 0
    %998 = vmatmul.mubr.bf16.gmra.mxu0 %v829
    %v999 = vpop.f32.mrf.mxu0
    %v1000 = vadd.f32 %v698, %v999
    %v1001 = vpop.f32.mrf.mxu0
    %v1002 = vadd.f32 %v702, %v1001
    %v1003 = vpop.f32.mrf.mxu0
    %v1004 = vadd.f32 %v698, %v1003
    %v1005 = vpop.f32.mrf.mxu0
    %v1006 = vadd.f32 %v702, %v1005
    %1007 = vmatprep.mubr.bf16.mxu0 0
    %1008 = vmatmul.mubr.bf16.gmra.mxu0 %v832
    %v1009 = vpop.f32.mrf.mxu0
    %v1010 = vadd.f32 %v698, %v1009
    %v1011 = vpop.f32.mrf.mxu0
    %v1012 = vadd.f32 %v702, %v1011
    %v1013 = vpop.f32.mrf.mxu0
    %v1014 = vadd.f32 %v698, %v1013
    %v1015 = vpop.f32.mrf.mxu0
    %v1016 = vadd.f32 %v702, %v1015
    %1017 = vmatprep.mubr.bf16.mxu0 0
    %1018 = vmatmul.mubr.bf16.gmra.mxu0 %v835
    %v1019 = vpop.f32.mrf.mxu0
    %v1020 = vadd.f32 %v698, %v1019
    %v1021 = vpop.f32.mrf.mxu0
    %v1022 = vadd.f32 %v702, %v1021
    %v1023 = vpop.f32.mrf.mxu0
    %v1024 = vadd.f32 %v698, %v1023
    %v1025 = vpop.f32.mrf.mxu0
    %v1026 = vadd.f32 %v702, %v1025
    %1027 = vmatprep.mubr.bf16.mxu0 0
    %1028 = vmatmul.mubr.bf16.gmra.mxu0 %v838
    %v1029 = vpop.f32.mrf.mxu0
    %v1030 = vadd.f32 %v698, %v1029
    %v1031 = vpop.f32.mrf.mxu0
    %v1032 = vadd.f32 %v702, %v1031
    %v1033 = vpop.f32.mrf.mxu0
    %v1034 = vadd.f32 %v698, %v1033
    %v1035 = vpop.f32.mrf.mxu0
    %v1036 = vadd.f32 %v702, %v1035
    %1037 = vmatprep.mubr.bf16.mxu0 0
    %1038 = vmatmul.mubr.bf16.gmra.mxu0 %v841
    %v1039 = vpop.f32.mrf.mxu0
    %v1040 = vadd.f32 %v698, %v1039
    %v1041 = vpop.f32.mrf.mxu0
    %v1042 = vadd.f32 %v702, %v1041
    %v1043 = vpop.f32.mrf.mxu0
    %v1044 = vadd.f32 %v698, %v1043
    %v1045 = vpop.f32.mrf.mxu0
    %v1046 = vadd.f32 %v702, %v1045
    %1047 = vmatprep.mubr.bf16.mxu0 0
    %1048 = vmatmul.mubr.bf16.gmra.mxu0 %v844
    %v1049 = vpop.f32.mrf.mxu0
    %v1050 = vadd.f32 %v698, %v1049
    %v1051 = vpop.f32.mrf.mxu0
    %v1052 = vadd.f32 %v702, %v1051
    %v1053 = vpop.f32.mrf.mxu0
    %v1054 = vadd.f32 %v698, %v1053
    %v1055 = vpop.f32.mrf.mxu0
    %v1056 = vadd.f32 %v702, %v1055
    %1057 = vmatprep.mubr.bf16.mxu0 0
    %1058 = vmatmul.mubr.bf16.gmra.mxu0 %v847
    %v1059 = vpop.f32.mrf.mxu0
    %v1060 = vadd.f32 %v698, %v1059
    %v1061 = vpop.f32.mrf.mxu0
    %v1062 = vadd.f32 %v702, %v1061
    %v1063 = vpop.f32.mrf.mxu0
    %v1064 = vadd.f32 %v698, %v1063
    %v1065 = vpop.f32.mrf.mxu0
    %v1066 = vadd.f32 %v702, %v1065
    %1067 = vmatprep.mubr.bf16.mxu0 0
    %1068 = vmatmul.mubr.bf16.gmra.mxu0 %v850
    %v1069 = vpop.f32.mrf.mxu0
    %v1070 = vadd.f32 %v698, %v1069
    %v1071 = vpop.f32.mrf.mxu0
    %v1072 = vadd.f32 %v702, %v1071
    %v1073 = vpop.f32.mrf.mxu0
    %v1074 = vadd.f32 %v698, %v1073
    %v1075 = vpop.f32.mrf.mxu0
    %v1076 = vadd.f32 %v702, %v1075
    %1077 = vdwg.mxu0
    %v1078 = vpack.c.bf16 %v891, %v887
    %v1079 = vpack.c.bf16 %v893, %v889
    %v1080 = vpack.c.bf16 %v1004, %v1000
    %v1081 = vpack.c.bf16 %v1006, %v1002
    %v1082 = vpack.c.bf16 %v901, %v897
    %v1083 = vpack.c.bf16 %v903, %v899
    %v1084 = vpack.c.bf16 %v1014, %v1010
    %v1085 = vpack.c.bf16 %v1016, %v1012
    %v1086 = vpack.c.bf16 %v911, %v907
    %v1087 = vpack.c.bf16 %v913, %v909
    %v1088 = vpack.c.bf16 %v1024, %v1020
    %v1089 = vpack.c.bf16 %v1026, %v1022
    %v1090 = vpack.c.bf16 %v921, %v917
    %v1091 = vpack.c.bf16 %v923, %v919
    %v1092 = vpack.c.bf16 %v1034, %v1030
    %v1093 = vpack.c.bf16 %v1036, %v1032
    %v1094 = vpack.c.bf16 %v931, %v927
    %v1095 = vpack.c.bf16 %v933, %v929
    %v1096 = vpack.c.bf16 %v1044, %v1040
    %v1097 = vpack.c.bf16 %v1046, %v1042
    %v1098 = vpack.c.bf16 %v941, %v937
    %v1099 = vpack.c.bf16 %v943, %v939
    %v1100 = vpack.c.bf16 %v1054, %v1050
    %v1101 = vpack.c.bf16 %v1056, %v1052
    %v1102 = vpack.c.bf16 %v951, %v947
    %v1103 = vpack.c.bf16 %v953, %v949
    %v1104 = vpack.c.bf16 %v1064, %v1060
    %v1105 = vpack.c.bf16 %v1066, %v1062
    %v1106 = vpack.c.bf16 %v961, %v957
    %v1107 = vpack.c.bf16 %v963, %v959
    %v1108 = vpack.c.bf16 %v1074, %v1070
    %v1109 = vpack.c.bf16 %v1076, %v1072
    %v1110 = vtanh.bf16.pop %v1078
    %v1111 = vtanh.bf16.pop %v1079
    %v1112 = vtanh.bf16.pop %v1080
    %v1113 = vtanh.bf16.pop %v1081
    %v1114 = vtanh.bf16.pop %v1082
    %v1115 = vtanh.bf16.pop %v1083
    %v1116 = vtanh.bf16.pop %v1084
    %v1117 = vtanh.bf16.pop %v1085
    %v1118 = vtanh.bf16.pop %v1086
    %v1119 = vtanh.bf16.pop %v1087
    %v1120 = vtanh.bf16.pop %v1088
    %v1121 = vtanh.bf16.pop %v1089
    %v1122 = vtanh.bf16.pop %v1090
    %v1123 = vtanh.bf16.pop %v1091
    %v1124 = vtanh.bf16.pop %v1092
    %v1125 = vtanh.bf16.pop %v1093
    %v1126 = vtanh.bf16.pop %v1094
    %v1127 = vtanh.bf16.pop %v1095
    %v1128 = vtanh.bf16.pop %v1096
    %v1129 = vtanh.bf16.pop %v1097
    %v1130 = vtanh.bf16.pop %v1098
    %v1131 = vtanh.bf16.pop %v1099
    %v1132 = vtanh.bf16.pop %v1100
    %v1133 = vtanh.bf16.pop %v1101
    %v1134 = vtanh.bf16.pop %v1102
    %v1135 = vtanh.bf16.pop %v1103
    %v1136 = vtanh.bf16.pop %v1104
    %v1137 = vtanh.bf16.pop %v1105
    %v1138 = vtanh.bf16.pop %v1106
    %v1139 = vtanh.bf16.pop %v1107
    %v1140 = vtanh.bf16.pop %v1108
    %v1141 = vtanh.bf16.pop %v1109
    %v1142 = vld [vmem:[#allocation8] sm:$0xff]
    %v1143 = vld [vmem:[#allocation8 + $0x8] sm:$0xff]
    %v1144 = vld [vmem:[#allocation8 + $0x10] sm:$0xff]
    %v1145 = vld [vmem:[#allocation8 + $0x18] sm:$0xff]
    %v1146 = vld [vmem:[#allocation8 + $0x20] sm:$0xff]
    %v1147 = vld [vmem:[#allocation8 + $0x28] sm:$0xff]
    %v1148 = vld [vmem:[#allocation8 + $0x30] sm:$0xff]
    %v1149 = vld [vmem:[#allocation8 + $0x38] sm:$0xff]
    %v1150 = vld [vmem:[#allocation8 + $0x40] sm:$0xff]
    %v1151 = vld [vmem:[#allocation8 + $0x48] sm:$0xff]
    %v1152 = vld [vmem:[#allocation8 + $0x50] sm:$0xff]
    %v1153 = vld [vmem:[#allocation8 + $0x58] sm:$0xff]
    %v1154 = vld [vmem:[#allocation8 + $0x60] sm:$0xff]
    %v1155 = vld [vmem:[#allocation8 + $0x68] sm:$0xff]
    %v1156 = vld [vmem:[#allocation8 + $0x70] sm:$0xff]
    %v1157 = vld [vmem:[#allocation8 + $0x78] sm:$0xff]
    %v1158 = vld [vmem:[#allocation8 + $0x80] sm:$0xff]
    %v1159 = vld [vmem:[#allocation8 + $0x88] sm:$0xff]
    %v1160 = vld [vmem:[#allocation8 + $0x90] sm:$0xff]
    %v1161 = vld [vmem:[#allocation8 + $0x98] sm:$0xff]
    %v1162 = vld [vmem:[#allocation8 + $0xa0] sm:$0xff]
    %v1163 = vld [vmem:[#allocation8 + $0xa8] sm:$0xff]
    %v1164 = vld [vmem:[#allocation8 + $0xb0] sm:$0xff]
    %v1165 = vld [vmem:[#allocation8 + $0xb8] sm:$0xff]
    %v1166 = vld [vmem:[#allocation8 + $0xc0] sm:$0xff]
    %v1167 = vld [vmem:[#allocation8 + $0xc8] sm:$0xff]
    %v1168 = vld [vmem:[#allocation8 + $0xd0] sm:$0xff]
    %v1169 = vld [vmem:[#allocation8 + $0xd8] sm:$0xff]
    %v1170 = vld [vmem:[#allocation8 + $0xe0] sm:$0xff]
    %v1171 = vld [vmem:[#allocation8 + $0xe8] sm:$0xff]
    %v1172 = vld [vmem:[#allocation8 + $0xf0] sm:$0xff]
    %v1173 = vld [vmem:[#allocation8 + $0xf8] sm:$0xff]
    %v1174 = vld [vmem:[#allocation8 + $0x100] sm:$0xff]
    %v1175 = vld [vmem:[#allocation8 + $0x108] sm:$0xff]
    %v1176 = vld [vmem:[#allocation8 + $0x110] sm:$0xff]
    %v1177 = vld [vmem:[#allocation8 + $0x118] sm:$0xff]
    %v1178 = vld [vmem:[#allocation8 + $0x120] sm:$0xff]
    %v1179 = vld [vmem:[#allocation8 + $0x128] sm:$0xff]
    %v1180 = vld [vmem:[#allocation8 + $0x130] sm:$0xff]
    %v1181 = vld [vmem:[#allocation8 + $0x138] sm:$0xff]
    %v1182 = vld [vmem:[#allocation8 + $0x140] sm:$0xff]
    %v1183 = vld [vmem:[#allocation8 + $0x148] sm:$0xff]
    %v1184 = vld [vmem:[#allocation8 + $0x150] sm:$0xff]
    %v1185 = vld [vmem:[#allocation8 + $0x158] sm:$0xff]
    %v1186 = vld [vmem:[#allocation8 + $0x160] sm:$0xff]
    %v1187 = vld [vmem:[#allocation8 + $0x168] sm:$0xff]
    %v1188 = vld [vmem:[#allocation8 + $0x170] sm:$0xff]
    %v1189 = vld [vmem:[#allocation8 + $0x178] sm:$0xff]
    %v1190 = vld [vmem:[#allocation8 + $0x180] sm:$0xff]
    %v1191 = vld [vmem:[#allocation8 + $0x188] sm:$0xff]
    %v1192 = vld [vmem:[#allocation8 + $0x190] sm:$0xff]
    %v1193 = vld [vmem:[#allocation8 + $0x198] sm:$0xff]
    %v1194 = vld [vmem:[#allocation8 + $0x1a0] sm:$0xff]
    %v1195 = vld [vmem:[#allocation8 + $0x1a8] sm:$0xff]
    %v1196 = vld [vmem:[#allocation8 + $0x1b0] sm:$0xff]
    %v1197 = vld [vmem:[#allocation8 + $0x1b8] sm:$0xff]
    %v1198 = vld [vmem:[#allocation8 + $0x1c0] sm:$0xff]
    %v1199 = vld [vmem:[#allocation8 + $0x1c8] sm:$0xff]
    %v1200 = vld [vmem:[#allocation8 + $0x1d0] sm:$0xff]
    %v1201 = vld [vmem:[#allocation8 + $0x1d8] sm:$0xff]
    %v1202 = vld [vmem:[#allocation8 + $0x1e0] sm:$0xff]
    %v1203 = vld [vmem:[#allocation8 + $0x1e8] sm:$0xff]
    %v1204 = vld [vmem:[#allocation8 + $0x1f0] sm:$0xff]
    %v1205 = vld [vmem:[#allocation8 + $0x1f8] sm:$0xff]
    %v1206 = vld [vmem:[%s8] sm:$0x3]
    %v1208 = vlaneseq
    %v1209 = vshrl.u32 %v1208, 7
    %v1210 = vsub.s32 0, %v1209
    %v1211 = vrot.slane %v1206, %v1210
    %v1212 = vlaneseq
    %v1213 = vshrl.u32 %v1212, 7
    %v1214 = vsub.s32 1, %v1213
    %v1215 = vrot.slane %v1206, %v1214
    %v1282 = vunpack.c.l.b16 %v1142
    %v1283 = vunpack.c.h.b16 %v1142
    %v1284 = vunpack.c.l.b16 %v1143
    %v1285 = vunpack.c.h.b16 %v1143
    %v1286 = vunpack.c.l.b16 %v1144
    %v1287 = vunpack.c.h.b16 %v1144
    %v1288 = vunpack.c.l.b16 %v1145
    %v1289 = vunpack.c.h.b16 %v1145
    %v1290 = vunpack.c.l.b16 %v1146
    %v1291 = vunpack.c.h.b16 %v1146
    %v1292 = vunpack.c.l.b16 %v1147
    %v1293 = vunpack.c.h.b16 %v1147
    %v1294 = vunpack.c.l.b16 %v1148
    %v1295 = vunpack.c.h.b16 %v1148
    %v1296 = vunpack.c.l.b16 %v1149
    %v1297 = vunpack.c.h.b16 %v1149
    %v1298 = vunpack.c.l.b16 %v1150
    %v1299 = vunpack.c.h.b16 %v1150
    %v1300 = vunpack.c.l.b16 %v1151
    %v1301 = vunpack.c.h.b16 %v1151
    %v1302 = vunpack.c.l.b16 %v1152
    %v1303 = vunpack.c.h.b16 %v1152
    %v1304 = vunpack.c.l.b16 %v1153
    %v1305 = vunpack.c.h.b16 %v1153
    %v1306 = vunpack.c.l.b16 %v1154
    %v1307 = vunpack.c.h.b16 %v1154
    %v1308 = vunpack.c.l.b16 %v1155
    %v1309 = vunpack.c.h.b16 %v1155
    %v1310 = vunpack.c.l.b16 %v1156
    %v1311 = vunpack.c.h.b16 %v1156
    %v1312 = vunpack.c.l.b16 %v1157
    %v1313 = vunpack.c.h.b16 %v1157
    %v1314 = vunpack.c.l.b16 %v1158
    %v1315 = vunpack.c.h.b16 %v1158
    %v1316 = vunpack.c.l.b16 %v1159
    %v1317 = vunpack.c.h.b16 %v1159
    %v1318 = vunpack.c.l.b16 %v1160
    %v1319 = vunpack.c.h.b16 %v1160
    %v1320 = vunpack.c.l.b16 %v1161
    %v1321 = vunpack.c.h.b16 %v1161
    %v1322 = vunpack.c.l.b16 %v1162
    %v1323 = vunpack.c.h.b16 %v1162
    %v1324 = vunpack.c.l.b16 %v1163
    %v1325 = vunpack.c.h.b16 %v1163
    %v1326 = vunpack.c.l.b16 %v1164
    %v1327 = vunpack.c.h.b16 %v1164
    %v1328 = vunpack.c.l.b16 %v1165
    %v1329 = vunpack.c.h.b16 %v1165
    %v1330 = vunpack.c.l.b16 %v1166
    %v1331 = vunpack.c.h.b16 %v1166
    %v1332 = vunpack.c.l.b16 %v1167
    %v1333 = vunpack.c.h.b16 %v1167
    %v1334 = vunpack.c.l.b16 %v1168
    %v1335 = vunpack.c.h.b16 %v1168
    %v1336 = vunpack.c.l.b16 %v1169
    %v1337 = vunpack.c.h.b16 %v1169
    %v1338 = vunpack.c.l.b16 %v1170
    %v1339 = vunpack.c.h.b16 %v1170
    %v1340 = vunpack.c.l.b16 %v1171
    %v1341 = vunpack.c.h.b16 %v1171
    %v1342 = vunpack.c.l.b16 %v1172
    %v1343 = vunpack.c.h.b16 %v1172
    %v1344 = vunpack.c.l.b16 %v1173
    %v1345 = vunpack.c.h.b16 %v1173
    %v1346 = vunpack.c.l.b16 %v1174
    %v1347 = vunpack.c.h.b16 %v1174
    %v1348 = vunpack.c.l.b16 %v1175
    %v1349 = vunpack.c.h.b16 %v1175
    %v1350 = vunpack.c.l.b16 %v1176
    %v1351 = vunpack.c.h.b16 %v1176
    %v1352 = vunpack.c.l.b16 %v1177
    %v1353 = vunpack.c.h.b16 %v1177
    %v1354 = vunpack.c.l.b16 %v1178
    %v1355 = vunpack.c.h.b16 %v1178
    %v1356 = vunpack.c.l.b16 %v1179
    %v1357 = vunpack.c.h.b16 %v1179
    %v1358 = vunpack.c.l.b16 %v1180
    %v1359 = vunpack.c.h.b16 %v1180
    %v1360 = vunpack.c.l.b16 %v1181
    %v1361 = vunpack.c.h.b16 %v1181
    %v1362 = vunpack.c.l.b16 %v1182
    %v1363 = vunpack.c.h.b16 %v1182
    %v1364 = vunpack.c.l.b16 %v1183
    %v1365 = vunpack.c.h.b16 %v1183
    %v1366 = vunpack.c.l.b16 %v1184
    %v1367 = vunpack.c.h.b16 %v1184
    %v1368 = vunpack.c.l.b16 %v1185
    %v1369 = vunpack.c.h.b16 %v1185
    %v1370 = vunpack.c.l.b16 %v1186
    %v1371 = vunpack.c.h.b16 %v1186
    %v1372 = vunpack.c.l.b16 %v1187
    %v1373 = vunpack.c.h.b16 %v1187
    %v1374 = vunpack.c.l.b16 %v1188
    %v1375 = vunpack.c.h.b16 %v1188
    %v1376 = vunpack.c.l.b16 %v1189
    %v1377 = vunpack.c.h.b16 %v1189
    %v1378 = vunpack.c.l.b16 %v1190
    %v1379 = vunpack.c.h.b16 %v1190
    %v1380 = vunpack.c.l.b16 %v1191
    %v1381 = vunpack.c.h.b16 %v1191
    %v1382 = vunpack.c.l.b16 %v1192
    %v1383 = vunpack.c.h.b16 %v1192
    %v1384 = vunpack.c.l.b16 %v1193
    %v1385 = vunpack.c.h.b16 %v1193
    %v1386 = vunpack.c.l.b16 %v1194
    %v1387 = vunpack.c.h.b16 %v1194
    %v1388 = vunpack.c.l.b16 %v1195
    %v1389 = vunpack.c.h.b16 %v1195
    %v1390 = vunpack.c.l.b16 %v1196
    %v1391 = vunpack.c.h.b16 %v1196
    %v1392 = vunpack.c.l.b16 %v1197
    %v1393 = vunpack.c.h.b16 %v1197
    %v1394 = vunpack.c.l.b16 %v1198
    %v1395 = vunpack.c.h.b16 %v1198
    %v1396 = vunpack.c.l.b16 %v1199
    %v1397 = vunpack.c.h.b16 %v1199
    %v1398 = vunpack.c.l.b16 %v1200
    %v1399 = vunpack.c.h.b16 %v1200
    %v1400 = vunpack.c.l.b16 %v1201
    %v1401 = vunpack.c.h.b16 %v1201
    %v1402 = vunpack.c.l.b16 %v1202
    %v1403 = vunpack.c.h.b16 %v1202
    %v1404 = vunpack.c.l.b16 %v1203
    %v1405 = vunpack.c.h.b16 %v1203
    %v1406 = vunpack.c.l.b16 %v1204
    %v1407 = vunpack.c.h.b16 %v1204
    %v1408 = vunpack.c.l.b16 %v1205
    %v1409 = vunpack.c.h.b16 %v1205
    %v1410 = vpack.c.b16 %v1284, %v1282
    %v1411 = vpack.c.b16 %v1285, %v1283
    %v1412 = vpack.c.b16 %v1288, %v1286
    %v1413 = vpack.c.b16 %v1289, %v1287
    %v1414 = vpack.c.b16 %v1292, %v1290
    %v1415 = vpack.c.b16 %v1293, %v1291
    %v1416 = vpack.c.b16 %v1296, %v1294
    %v1417 = vpack.c.b16 %v1297, %v1295
    %v1418 = vpack.c.b16 %v1300, %v1298
    %v1419 = vpack.c.b16 %v1301, %v1299
    %v1420 = vpack.c.b16 %v1304, %v1302
    %v1421 = vpack.c.b16 %v1305, %v1303
    %v1422 = vpack.c.b16 %v1308, %v1306
    %v1423 = vpack.c.b16 %v1309, %v1307
    %v1424 = vpack.c.b16 %v1312, %v1310
    %v1425 = vpack.c.b16 %v1313, %v1311
    %v1426 = vpack.c.b16 %v1316, %v1314
    %v1427 = vpack.c.b16 %v1317, %v1315
    %v1428 = vpack.c.b16 %v1320, %v1318
    %v1429 = vpack.c.b16 %v1321, %v1319
    %v1430 = vpack.c.b16 %v1324, %v1322
    %v1431 = vpack.c.b16 %v1325, %v1323
    %v1432 = vpack.c.b16 %v1328, %v1326
    %v1433 = vpack.c.b16 %v1329, %v1327
    %v1434 = vpack.c.b16 %v1332, %v1330
    %v1435 = vpack.c.b16 %v1333, %v1331
    %v1436 = vpack.c.b16 %v1336, %v1334
    %v1437 = vpack.c.b16 %v1337, %v1335
    %v1438 = vpack.c.b16 %v1340, %v1338
    %v1439 = vpack.c.b16 %v1341, %v1339
    %v1440 = vpack.c.b16 %v1344, %v1342
    %v1441 = vpack.c.b16 %v1345, %v1343
    %v1442 = vpack.c.b16 %v1348, %v1346
    %v1443 = vpack.c.b16 %v1349, %v1347
    %v1444 = vpack.c.b16 %v1352, %v1350
    %v1445 = vpack.c.b16 %v1353, %v1351
    %v1446 = vpack.c.b16 %v1356, %v1354
    %v1447 = vpack.c.b16 %v1357, %v1355
    %v1448 = vpack.c.b16 %v1360, %v1358
    %v1449 = vpack.c.b16 %v1361, %v1359
    %v1450 = vpack.c.b16 %v1364, %v1362
    %v1451 = vpack.c.b16 %v1365, %v1363
    %v1452 = vpack.c.b16 %v1368, %v1366
    %v1453 = vpack.c.b16 %v1369, %v1367
    %v1454 = vpack.c.b16 %v1372, %v1370
    %v1455 = vpack.c.b16 %v1373, %v1371
    %v1456 = vpack.c.b16 %v1376, %v1374
    %v1457 = vpack.c.b16 %v1377, %v1375
    %v1458 = vpack.c.b16 %v1380, %v1378
    %v1459 = vpack.c.b16 %v1381, %v1379
    %v1460 = vpack.c.b16 %v1384, %v1382
    %v1461 = vpack.c.b16 %v1385, %v1383
    %v1462 = vpack.c.b16 %v1388, %v1386
    %v1463 = vpack.c.b16 %v1389, %v1387
    %v1464 = vpack.c.b16 %v1392, %v1390
    %v1465 = vpack.c.b16 %v1393, %v1391
    %v1466 = vpack.c.b16 %v1396, %v1394
    %v1467 = vpack.c.b16 %v1397, %v1395
    %v1468 = vpack.c.b16 %v1400, %v1398
    %v1469 = vpack.c.b16 %v1401, %v1399
    %v1470 = vpack.c.b16 %v1404, %v1402
    %v1471 = vpack.c.b16 %v1405, %v1403
    %v1472 = vpack.c.b16 %v1408, %v1406
    %v1473 = vpack.c.b16 %v1409, %v1407
    %1538 = vmatprep.subr.bf16.mxu0 %v1425
    %1539 = vmatpush1.bf16.msra.mxu0 %v1424
    %1540 = vmatprep.subr.bf16.mxu0 %v1423
    %1541 = vmatpush1.bf16.msra.mxu0 %v1422
    %1542 = vmatprep.subr.bf16.mxu0 %v1421
    %1543 = vmatpush1.bf16.msra.mxu0 %v1420
    %1544 = vmatprep.subr.bf16.mxu0 %v1419
    %1545 = vmatpush1.bf16.msra.mxu0 %v1418
    %1546 = vmatprep.subr.bf16.mxu0 %v1417
    %1547 = vmatpush1.bf16.msra.mxu0 %v1416
    %1548 = vmatprep.subr.bf16.mxu0 %v1415
    %1549 = vmatpush1.bf16.msra.mxu0 %v1414
    %1550 = vmatprep.subr.bf16.mxu0 %v1413
    %1551 = vmatpush1.bf16.msra.mxu0 %v1412
    %1552 = vmatprep.subr.bf16.mxu0 %v1411
    %1553 = vmatpush1.bf16.msra.mxu0 %v1410
    %1554 = vmatprep.subr.bf16.mxu0 %v1441
    %1555 = vmatpush2.bf16.msra.mxu0 %v1440
    %1556 = vmatprep.subr.bf16.mxu0 %v1439
    %1557 = vmatpush2.bf16.msra.mxu0 %v1438
    %1558 = vmatprep.subr.bf16.mxu0 %v1437
    %1559 = vmatpush2.bf16.msra.mxu0 %v1436
    %1560 = vmatprep.subr.bf16.mxu0 %v1435
    %1561 = vmatpush2.bf16.msra.mxu0 %v1434
    %1562 = vmatprep.subr.bf16.mxu0 %v1433
    %1563 = vmatpush2.bf16.msra.mxu0 %v1432
    %1564 = vmatprep.subr.bf16.mxu0 %v1431
    %1565 = vmatpush2.bf16.msra.mxu0 %v1430
    %1566 = vmatprep.subr.bf16.mxu0 %v1429
    %1567 = vmatpush2.bf16.msra.mxu0 %v1428
    %1568 = vmatprep.subr.bf16.mxu0 %v1427
    %1569 = vmatpush2.bf16.msra.mxu0 %v1426
    %1570 = vmatprep.mubr.bf16.mxu0 %v1111
    %1571 = vmatmul.mubr.bf16.gmra.mxu0 %v1110
    %v1572 = vpop.f32.mrf.mxu0
    %v1573 = vadd.f32 %v1211, %v1572
    %v1574 = vpop.f32.mrf.mxu0
    %v1575 = vadd.f32 %v1215, %v1574
    %v1576 = vpop.f32.mrf.mxu0
    %v1577 = vadd.f32 %v1211, %v1576
    %v1578 = vpop.f32.mrf.mxu0
    %v1579 = vadd.f32 %v1215, %v1578
    %1580 = vmatprep.mubr.bf16.mxu0 %v1115
    %1581 = vmatmul.mubr.bf16.gmra.mxu0 %v1114
    %v1582 = vpop.f32.mrf.mxu0
    %v1583 = vadd.f32 %v1211, %v1582
    %v1584 = vpop.f32.mrf.mxu0
    %v1585 = vadd.f32 %v1215, %v1584
    %v1586 = vpop.f32.mrf.mxu0
    %v1587 = vadd.f32 %v1211, %v1586
    %v1588 = vpop.f32.mrf.mxu0
    %v1589 = vadd.f32 %v1215, %v1588
    %1590 = vmatprep.mubr.bf16.mxu0 %v1119
    %1591 = vmatmul.mubr.bf16.gmra.mxu0 %v1118
    %v1592 = vpop.f32.mrf.mxu0
    %v1593 = vadd.f32 %v1211, %v1592
    %v1594 = vpop.f32.mrf.mxu0
    %v1595 = vadd.f32 %v1215, %v1594
    %v1596 = vpop.f32.mrf.mxu0
    %v1597 = vadd.f32 %v1211, %v1596
    %v1598 = vpop.f32.mrf.mxu0
    %v1599 = vadd.f32 %v1215, %v1598
    %1600 = vmatprep.mubr.bf16.mxu0 %v1123
    %1601 = vmatmul.mubr.bf16.gmra.mxu0 %v1122
    %v1602 = vpop.f32.mrf.mxu0
    %v1603 = vadd.f32 %v1211, %v1602
    %v1604 = vpop.f32.mrf.mxu0
    %v1605 = vadd.f32 %v1215, %v1604
    %v1606 = vpop.f32.mrf.mxu0
    %v1607 = vadd.f32 %v1211, %v1606
    %v1608 = vpop.f32.mrf.mxu0
    %v1609 = vadd.f32 %v1215, %v1608
    %1610 = vmatprep.mubr.bf16.mxu0 %v1127
    %1611 = vmatmul.mubr.bf16.gmra.mxu0 %v1126
    %v1612 = vpop.f32.mrf.mxu0
    %v1613 = vadd.f32 %v1211, %v1612
    %v1614 = vpop.f32.mrf.mxu0
    %v1615 = vadd.f32 %v1215, %v1614
    %v1616 = vpop.f32.mrf.mxu0
    %v1617 = vadd.f32 %v1211, %v1616
    %v1618 = vpop.f32.mrf.mxu0
    %v1619 = vadd.f32 %v1215, %v1618
    %1620 = vmatprep.mubr.bf16.mxu0 %v1131
    %1621 = vmatmul.mubr.bf16.gmra.mxu0 %v1130
    %v1622 = vpop.f32.mrf.mxu0
    %v1623 = vadd.f32 %v1211, %v1622
    %v1624 = vpop.f32.mrf.mxu0
    %v1625 = vadd.f32 %v1215, %v1624
    %v1626 = vpop.f32.mrf.mxu0
    %v1627 = vadd.f32 %v1211, %v1626
    %v1628 = vpop.f32.mrf.mxu0
    %v1629 = vadd.f32 %v1215, %v1628
    %1630 = vmatprep.mubr.bf16.mxu0 %v1135
    %1631 = vmatmul.mubr.bf16.gmra.mxu0 %v1134
    %v1632 = vpop.f32.mrf.mxu0
    %v1633 = vadd.f32 %v1211, %v1632
    %v1634 = vpop.f32.mrf.mxu0
    %v1635 = vadd.f32 %v1215, %v1634
    %v1636 = vpop.f32.mrf.mxu0
    %v1637 = vadd.f32 %v1211, %v1636
    %v1638 = vpop.f32.mrf.mxu0
    %v1639 = vadd.f32 %v1215, %v1638
    %1640 = vmatprep.mubr.bf16.mxu0 %v1139
    %1641 = vmatmul.mubr.bf16.gmra.mxu0 %v1138
    %v1642 = vpop.f32.mrf.mxu0
    %v1643 = vadd.f32 %v1211, %v1642
    %v1644 = vpop.f32.mrf.mxu0
    %v1645 = vadd.f32 %v1215, %v1644
    %v1646 = vpop.f32.mrf.mxu0
    %v1647 = vadd.f32 %v1211, %v1646
    %v1648 = vpop.f32.mrf.mxu0
    %v1649 = vadd.f32 %v1215, %v1648
    %1650 = vdwg.mxu0
    %1651 = vmatprep.subr.bf16.mxu0 %v1457
    %1652 = vmatpush1.bf16.msra.mxu0 %v1456
    %1653 = vmatprep.subr.bf16.mxu0 %v1455
    %1654 = vmatpush1.bf16.msra.mxu0 %v1454
    %1655 = vmatprep.subr.bf16.mxu0 %v1453
    %1656 = vmatpush1.bf16.msra.mxu0 %v1452
    %1657 = vmatprep.subr.bf16.mxu0 %v1451
    %1658 = vmatpush1.bf16.msra.mxu0 %v1450
    %1659 = vmatprep.subr.bf16.mxu0 %v1449
    %1660 = vmatpush1.bf16.msra.mxu0 %v1448
    %1661 = vmatprep.subr.bf16.mxu0 %v1447
    %1662 = vmatpush1.bf16.msra.mxu0 %v1446
    %1663 = vmatprep.subr.bf16.mxu0 %v1445
    %1664 = vmatpush1.bf16.msra.mxu0 %v1444
    %1665 = vmatprep.subr.bf16.mxu0 %v1443
    %1666 = vmatpush1.bf16.msra.mxu0 %v1442
    %1667 = vmatprep.subr.bf16.mxu0 %v1473
    %1668 = vmatpush2.bf16.msra.mxu0 %v1472
    %1669 = vmatprep.subr.bf16.mxu0 %v1471
    %1670 = vmatpush2.bf16.msra.mxu0 %v1470
    %1671 = vmatprep.subr.bf16.mxu0 %v1469
    %1672 = vmatpush2.bf16.msra.mxu0 %v1468
    %1673 = vmatprep.subr.bf16.mxu0 %v1467
    %1674 = vmatpush2.bf16.msra.mxu0 %v1466
    %1675 = vmatprep.subr.bf16.mxu0 %v1465
    %1676 = vmatpush2.bf16.msra.mxu0 %v1464
    %1677 = vmatprep.subr.bf16.mxu0 %v1463
    %1678 = vmatpush2.bf16.msra.mxu0 %v1462
    %1679 = vmatprep.subr.bf16.mxu0 %v1461
    %1680 = vmatpush2.bf16.msra.mxu0 %v1460
    %1681 = vmatprep.subr.bf16.mxu0 %v1459
    %1682 = vmatpush2.bf16.msra.mxu0 %v1458
    %1683 = vmatprep.mubr.bf16.mxu0 %v1113
    %1684 = vmatmul.mubr.bf16.gmra.mxu0 %v1112
    %v1685 = vpop.f32.mrf.mxu0
    %v1686 = vadd.f32 %v1573, %v1685
    %v1687 = vpop.f32.mrf.mxu0
    %v1688 = vadd.f32 %v1575, %v1687
    %v1689 = vpop.f32.mrf.mxu0
    %v1690 = vadd.f32 %v1577, %v1689
    %v1691 = vpop.f32.mrf.mxu0
    %v1692 = vadd.f32 %v1579, %v1691
    %1693 = vmatprep.mubr.bf16.mxu0 %v1117
    %1694 = vmatmul.mubr.bf16.gmra.mxu0 %v1116
    %v1695 = vpop.f32.mrf.mxu0
    %v1696 = vadd.f32 %v1583, %v1695
    %v1697 = vpop.f32.mrf.mxu0
    %v1698 = vadd.f32 %v1585, %v1697
    %v1699 = vpop.f32.mrf.mxu0
    %v1700 = vadd.f32 %v1587, %v1699
    %v1701 = vpop.f32.mrf.mxu0
    %v1702 = vadd.f32 %v1589, %v1701
    %1703 = vmatprep.mubr.bf16.mxu0 %v1121
    %1704 = vmatmul.mubr.bf16.gmra.mxu0 %v1120
    %v1705 = vpop.f32.mrf.mxu0
    %v1706 = vadd.f32 %v1593, %v1705
    %v1707 = vpop.f32.mrf.mxu0
    %v1708 = vadd.f32 %v1595, %v1707
    %v1709 = vpop.f32.mrf.mxu0
    %v1710 = vadd.f32 %v1597, %v1709
    %v1711 = vpop.f32.mrf.mxu0
    %v1712 = vadd.f32 %v1599, %v1711
    %1713 = vmatprep.mubr.bf16.mxu0 %v1125
    %1714 = vmatmul.mubr.bf16.gmra.mxu0 %v1124
    %v1715 = vpop.f32.mrf.mxu0
    %v1716 = vadd.f32 %v1603, %v1715
    %v1717 = vpop.f32.mrf.mxu0
    %v1718 = vadd.f32 %v1605, %v1717
    %v1719 = vpop.f32.mrf.mxu0
    %v1720 = vadd.f32 %v1607, %v1719
    %v1721 = vpop.f32.mrf.mxu0
    %v1722 = vadd.f32 %v1609, %v1721
    %1723 = vmatprep.mubr.bf16.mxu0 %v1129
    %1724 = vmatmul.mubr.bf16.gmra.mxu0 %v1128
    %v1725 = vpop.f32.mrf.mxu0
    %v1726 = vadd.f32 %v1613, %v1725
    %v1727 = vpop.f32.mrf.mxu0
    %v1728 = vadd.f32 %v1615, %v1727
    %v1729 = vpop.f32.mrf.mxu0
    %v1730 = vadd.f32 %v1617, %v1729
    %v1731 = vpop.f32.mrf.mxu0
    %v1732 = vadd.f32 %v1619, %v1731
    %1733 = vmatprep.mubr.bf16.mxu0 %v1133
    %1734 = vmatmul.mubr.bf16.gmra.mxu0 %v1132
    %v1735 = vpop.f32.mrf.mxu0
    %v1736 = vadd.f32 %v1623, %v1735
    %v1737 = vpop.f32.mrf.mxu0
    %v1738 = vadd.f32 %v1625, %v1737
    %v1739 = vpop.f32.mrf.mxu0
    %v1740 = vadd.f32 %v1627, %v1739
    %v1741 = vpop.f32.mrf.mxu0
    %v1742 = vadd.f32 %v1629, %v1741
    %1743 = vmatprep.mubr.bf16.mxu0 %v1137
    %1744 = vmatmul.mubr.bf16.gmra.mxu0 %v1136
    %v1745 = vpop.f32.mrf.mxu0
    %v1746 = vadd.f32 %v1633, %v1745
    %v1747 = vpop.f32.mrf.mxu0
    %v1748 = vadd.f32 %v1635, %v1747
    %v1749 = vpop.f32.mrf.mxu0
    %v1750 = vadd.f32 %v1637, %v1749
    %v1751 = vpop.f32.mrf.mxu0
    %v1752 = vadd.f32 %v1639, %v1751
    %1753 = vmatprep.mubr.bf16.mxu0 %v1141
    %1754 = vmatmul.mubr.bf16.gmra.mxu0 %v1140
    %v1755 = vpop.f32.mrf.mxu0
    %v1756 = vadd.f32 %v1643, %v1755
    %v1757 = vpop.f32.mrf.mxu0
    %v1758 = vadd.f32 %v1645, %v1757
    %v1759 = vpop.f32.mrf.mxu0
    %v1760 = vadd.f32 %v1647, %v1759
    %v1761 = vpop.f32.mrf.mxu0
    %v1762 = vadd.f32 %v1649, %v1761
    %1763 = vdwg.mxu0
    %v1764 = vpack.c.bf16 %v1690, %v1686
    %v1765 = vpack.c.bf16 %v1692, %v1688
    %v1766 = vpack.c.bf16 %v1700, %v1696
    %v1767 = vpack.c.bf16 %v1702, %v1698
    %v1768 = vpack.c.bf16 %v1710, %v1706
    %v1769 = vpack.c.bf16 %v1712, %v1708
    %v1770 = vpack.c.bf16 %v1720, %v1716
    %v1771 = vpack.c.bf16 %v1722, %v1718
    %v1772 = vpack.c.bf16 %v1730, %v1726
    %v1773 = vpack.c.bf16 %v1732, %v1728
    %v1774 = vpack.c.bf16 %v1740, %v1736
    %v1775 = vpack.c.bf16 %v1742, %v1738
    %v1776 = vpack.c.bf16 %v1750, %v1746
    %v1777 = vpack.c.bf16 %v1752, %v1748
    %v1778 = vpack.c.bf16 %v1760, %v1756
    %v1779 = vpack.c.bf16 %v1762, %v1758
    %v1780 = vtanh.bf16.pop %v1764
    %v1781 = vtanh.bf16.pop %v1765
    %v1782 = vtanh.bf16.pop %v1766
    %v1783 = vtanh.bf16.pop %v1767
    %v1784 = vtanh.bf16.pop %v1768
    %v1785 = vtanh.bf16.pop %v1769
    %v1786 = vtanh.bf16.pop %v1770
    %v1787 = vtanh.bf16.pop %v1771
    %v1788 = vtanh.bf16.pop %v1772
    %v1789 = vtanh.bf16.pop %v1773
    %v1790 = vtanh.bf16.pop %v1774
    %v1791 = vtanh.bf16.pop %v1775
    %v1792 = vtanh.bf16.pop %v1776
    %v1793 = vtanh.bf16.pop %v1777
    %v1794 = vtanh.bf16.pop %v1778
    %v1795 = vtanh.bf16.pop %v1779
    %v1796 = vld [vmem:[%s9] sm:$0xf]
    %v1797 = vld [vmem:[%s9 + $0x4] sm:$0xf]
    %v1798 = vld [vmem:[%s9 + $0x8] sm:$0xf]
    %v1799 = vld [vmem:[%s9 + $0xc] sm:$0xf]
    %v1800 = vld [vmem:[%s9 + $0x10] sm:$0xf]
    %v1801 = vld [vmem:[%s9 + $0x14] sm:$0xf]
    %v1802 = vld [vmem:[%s9 + $0x18] sm:$0xf]
    %v1803 = vld [vmem:[%s9 + $0x1c] sm:$0xf]
    %v1804 = vld [vmem:[%s9 + $0x20] sm:$0xf]
    %v1805 = vld [vmem:[%s9 + $0x24] sm:$0xf]
    %v1806 = vld [vmem:[%s9 + $0x28] sm:$0xf]
    %v1807 = vld [vmem:[%s9 + $0x2c] sm:$0xf]
    %v1808 = vld [vmem:[%s9 + $0x30] sm:$0xf]
    %v1809 = vld [vmem:[%s9 + $0x34] sm:$0xf]
    %v1810 = vld [vmem:[%s9 + $0x38] sm:$0xf]
    %v1811 = vld [vmem:[%s9 + $0x3c] sm:$0xf]
    %v1812 = vld [vmem:[%s9 + $0x40] sm:$0xf]
    %v1813 = vld [vmem:[%s9 + $0x44] sm:$0xf]
    %v1814 = vld [vmem:[%s9 + $0x48] sm:$0xf]
    %v1815 = vld [vmem:[%s9 + $0x4c] sm:$0xf]
    %v1816 = vld [vmem:[%s9 + $0x50] sm:$0xf]
    %v1817 = vld [vmem:[%s9 + $0x54] sm:$0xf]
    %v1818 = vld [vmem:[%s9 + $0x58] sm:$0xf]
    %v1819 = vld [vmem:[%s9 + $0x5c] sm:$0xf]
    %v1820 = vld [vmem:[%s9 + $0x60] sm:$0xf]
    %v1821 = vld [vmem:[%s9 + $0x64] sm:$0xf]
    %v1822 = vld [vmem:[%s9 + $0x68] sm:$0xf]
    %v1823 = vld [vmem:[%s9 + $0x6c] sm:$0xf]
    %v1824 = vld [vmem:[%s9 + $0x70] sm:$0xf]
    %v1825 = vld [vmem:[%s9 + $0x74] sm:$0xf]
    %v1826 = vld [vmem:[%s9 + $0x78] sm:$0xf]
    %v1827 = vld [vmem:[%s9 + $0x7c] sm:$0xf]
    %v1828 = vld [vmem:[%s10] sm:$0x1]
    %v1830 = vlaneseq
    %v1831 = vshrl.u32 %v1830, 7
    %v1832 = vsub.s32 0, %v1831
    %v1833 = vrot.slane %v1828, %v1832
    %v1867 = vunpack.c.l.b16 %v1796
    %v1868 = vunpack.c.l.b16 %v1797
    %v1869 = vunpack.c.l.b16 %v1798
    %v1870 = vunpack.c.l.b16 %v1799
    %v1871 = vunpack.c.l.b16 %v1800
    %v1872 = vunpack.c.l.b16 %v1801
    %v1873 = vunpack.c.l.b16 %v1802
    %v1874 = vunpack.c.l.b16 %v1803
    %v1875 = vunpack.c.l.b16 %v1804
    %v1876 = vunpack.c.l.b16 %v1805
    %v1877 = vunpack.c.l.b16 %v1806
    %v1878 = vunpack.c.l.b16 %v1807
    %v1879 = vunpack.c.l.b16 %v1808
    %v1880 = vunpack.c.l.b16 %v1809
    %v1881 = vunpack.c.l.b16 %v1810
    %v1882 = vunpack.c.l.b16 %v1811
    %v1883 = vunpack.c.l.b16 %v1812
    %v1884 = vunpack.c.l.b16 %v1813
    %v1885 = vunpack.c.l.b16 %v1814
    %v1886 = vunpack.c.l.b16 %v1815
    %v1887 = vunpack.c.l.b16 %v1816
    %v1888 = vunpack.c.l.b16 %v1817
    %v1889 = vunpack.c.l.b16 %v1818
    %v1890 = vunpack.c.l.b16 %v1819
    %v1891 = vunpack.c.l.b16 %v1820
    %v1892 = vunpack.c.l.b16 %v1821
    %v1893 = vunpack.c.l.b16 %v1822
    %v1894 = vunpack.c.l.b16 %v1823
    %v1895 = vunpack.c.l.b16 %v1824
    %v1896 = vunpack.c.l.b16 %v1825
    %v1897 = vunpack.c.l.b16 %v1826
    %v1898 = vunpack.c.l.b16 %v1827
    %v1899 = vpack.c.b16 %v1868, %v1867
    %v1900 = vpack.c.b16 %v1870, %v1869
    %v1901 = vpack.c.b16 %v1872, %v1871
    %v1902 = vpack.c.b16 %v1874, %v1873
    %v1903 = vpack.c.b16 %v1876, %v1875
    %v1904 = vpack.c.b16 %v1878, %v1877
    %v1905 = vpack.c.b16 %v1880, %v1879
    %v1906 = vpack.c.b16 %v1882, %v1881
    %v1907 = vpack.c.b16 %v1884, %v1883
    %v1908 = vpack.c.b16 %v1886, %v1885
    %v1909 = vpack.c.b16 %v1888, %v1887
    %v1910 = vpack.c.b16 %v1890, %v1889
    %v1911 = vpack.c.b16 %v1892, %v1891
    %v1912 = vpack.c.b16 %v1894, %v1893
    %v1913 = vpack.c.b16 %v1896, %v1895
    %v1914 = vpack.c.b16 %v1898, %v1897
    %1931 = vmatprep.subr.bf16.mxu0 0
    %1932 = vmatpush1.bf16.msra.mxu0 %v1906
    %1933 = vmatprep.subr.bf16.mxu0 0
    %1934 = vmatpush1.bf16.msra.mxu0 %v1905
    %1935 = vmatprep.subr.bf16.mxu0 0
    %1936 = vmatpush1.bf16.msra.mxu0 %v1904
    %1937 = vmatprep.subr.bf16.mxu0 0
    %1938 = vmatpush1.bf16.msra.mxu0 %v1903
    %1939 = vmatprep.subr.bf16.mxu0 0
    %1940 = vmatpush1.bf16.msra.mxu0 %v1902
    %1941 = vmatprep.subr.bf16.mxu0 0
    %1942 = vmatpush1.bf16.msra.mxu0 %v1901
    %1943 = vmatprep.subr.bf16.mxu0 0
    %1944 = vmatpush1.bf16.msra.mxu0 %v1900
    %1945 = vmatprep.subr.bf16.mxu0 0
    %1946 = vmatpush1.bf16.msra.mxu0 %v1899
    %1947 = vmatprep.subr.bf16.mxu0 0
    %1948 = vmatpush2.bf16.msra.mxu0 %v1914
    %1949 = vmatprep.subr.bf16.mxu0 0
    %1950 = vmatpush2.bf16.msra.mxu0 %v1913
    %1951 = vmatprep.subr.bf16.mxu0 0
    %1952 = vmatpush2.bf16.msra.mxu0 %v1912
    %1953 = vmatprep.subr.bf16.mxu0 0
    %1954 = vmatpush2.bf16.msra.mxu0 %v1911
    %1955 = vmatprep.subr.bf16.mxu0 0
    %1956 = vmatpush2.bf16.msra.mxu0 %v1910
    %1957 = vmatprep.subr.bf16.mxu0 0
    %1958 = vmatpush2.bf16.msra.mxu0 %v1909
    %1959 = vmatprep.subr.bf16.mxu0 0
    %1960 = vmatpush2.bf16.msra.mxu0 %v1908
    %1961 = vmatprep.subr.bf16.mxu0 0
    %1962 = vmatpush2.bf16.msra.mxu0 %v1907
    %1963 = vmatprep.mubr.bf16.mxu0 %v1781
    %1964 = vmatmul.mubr.bf16.gmra.mxu0 %v1780
    %v1965 = vpop.f32.mrf.mxu0
    %v1966 = vadd.f32 %v1833, %v1965
    %v1967 = vpop.f32.mrf.mxu0
    %v1968 = vpop.f32.mrf.mxu0
    %v1969 = vadd.f32 %v1833, %v1968
    %v1970 = vpop.f32.mrf.mxu0
    %1971 = vmatprep.mubr.bf16.mxu0 %v1783
    %1972 = vmatmul.mubr.bf16.gmra.mxu0 %v1782
    %v1973 = vpop.f32.mrf.mxu0
    %v1974 = vadd.f32 %v1833, %v1973
    %v1975 = vpop.f32.mrf.mxu0
    %v1976 = vpop.f32.mrf.mxu0
    %v1977 = vadd.f32 %v1833, %v1976
    %v1978 = vpop.f32.mrf.mxu0
    %1979 = vmatprep.mubr.bf16.mxu0 %v1785
    %1980 = vmatmul.mubr.bf16.gmra.mxu0 %v1784
    %v1981 = vpop.f32.mrf.mxu0
    %v1982 = vadd.f32 %v1833, %v1981
    %v1983 = vpop.f32.mrf.mxu0
    %v1984 = vpop.f32.mrf.mxu0
    %v1985 = vadd.f32 %v1833, %v1984
    %v1986 = vpop.f32.mrf.mxu0
    %1987 = vmatprep.mubr.bf16.mxu0 %v1787
    %1988 = vmatmul.mubr.bf16.gmra.mxu0 %v1786
    %v1989 = vpop.f32.mrf.mxu0
    %v1990 = vadd.f32 %v1833, %v1989
    %v1991 = vpop.f32.mrf.mxu0
    %v1992 = vpop.f32.mrf.mxu0
    %v1993 = vadd.f32 %v1833, %v1992
    %v1994 = vpop.f32.mrf.mxu0
    %1995 = vmatprep.mubr.bf16.mxu0 %v1789
    %1996 = vmatmul.mubr.bf16.gmra.mxu0 %v1788
    %v1997 = vpop.f32.mrf.mxu0
    %v1998 = vadd.f32 %v1833, %v1997
    %v1999 = vpop.f32.mrf.mxu0
    %v2000 = vpop.f32.mrf.mxu0
    %v2001 = vadd.f32 %v1833, %v2000
    %v2002 = vpop.f32.mrf.mxu0
    %2003 = vmatprep.mubr.bf16.mxu0 %v1791
    %2004 = vmatmul.mubr.bf16.gmra.mxu0 %v1790
    %v2005 = vpop.f32.mrf.mxu0
    %v2006 = vadd.f32 %v1833, %v2005
    %v2007 = vpop.f32.mrf.mxu0
    %v2008 = vpop.f32.mrf.mxu0
    %v2009 = vadd.f32 %v1833, %v2008
    %v2010 = vpop.f32.mrf.mxu0
    %2011 = vmatprep.mubr.bf16.mxu0 %v1793
    %2012 = vmatmul.mubr.bf16.gmra.mxu0 %v1792
    %v2013 = vpop.f32.mrf.mxu0
    %v2014 = vadd.f32 %v1833, %v2013
    %v2015 = vpop.f32.mrf.mxu0
    %v2016 = vpop.f32.mrf.mxu0
    %v2017 = vadd.f32 %v1833, %v2016
    %v2018 = vpop.f32.mrf.mxu0
    %2019 = vmatprep.mubr.bf16.mxu0 %v1795
    %2020 = vmatmul.mubr.bf16.gmra.mxu0 %v1794
    %v2021 = vpop.f32.mrf.mxu0
    %v2022 = vadd.f32 %v1833, %v2021
    %v2023 = vpop.f32.mrf.mxu0
    %v2024 = vpop.f32.mrf.mxu0
    %v2025 = vadd.f32 %v1833, %v2024
    %v2026 = vpop.f32.mrf.mxu0
    %2027 = vdwg.mxu0
    %v2028 = vpack.c.bf16 %v1969, %v1966
    %v2029 = vpack.c.bf16 %v1977, %v1974
    %v2030 = vpack.c.bf16 %v1985, %v1982
    %v2031 = vpack.c.bf16 %v1993, %v1990
    %v2032 = vpack.c.bf16 %v2001, %v1998
    %v2033 = vpack.c.bf16 %v2009, %v2006
    %v2034 = vpack.c.bf16 %v2017, %v2014
    %v2035 = vpack.c.bf16 %v2025, %v2022
    %v2036 = vtanh.bf16.pop %v2028
    %v2037 = vtanh.bf16.pop %v2029
    %v2038 = vtanh.bf16.pop %v2030
    %v2039 = vtanh.bf16.pop %v2031
    %v2040 = vtanh.bf16.pop %v2032
    %v2041 = vtanh.bf16.pop %v2033
    %v2042 = vtanh.bf16.pop %v2034
    %v2043 = vtanh.bf16.pop %v2035
    %v2044 = vld [vmem:[%s11] sm:$0x1]
    %s2045 = sld [smem:[#allocation9 + $0x2]]
    %v2046 = vstv %s2045
    %2047 = vmatprep.subr.bf16.mxu0 0
    %2048 = vmatpush1.bf16.xpose.msra.mxu0 %v2043
    %2049 = vmatprep.subr.bf16.mxu0 0
    %2050 = vmatpush1.bf16.xpose.msra.mxu0 %v2042
    %2051 = vmatprep.subr.bf16.mxu0 0
    %2052 = vmatpush1.bf16.xpose.msra.mxu0 %v2041
    %2053 = vmatprep.subr.bf16.mxu0 0
    %2054 = vmatpush1.bf16.xpose.msra.mxu0 %v2040
    %2055 = vmatprep.subr.bf16.mxu0 0
    %2056 = vmatpush1.bf16.xpose.msra.mxu0 %v2039
    %2057 = vmatprep.subr.bf16.mxu0 0
    %2058 = vmatpush1.bf16.xpose.msra.mxu0 %v2038
    %2059 = vmatprep.subr.bf16.mxu0 0
    %2060 = vmatpush1.bf16.xpose.msra.mxu0 %v2037
    %2061 = vmatprep.subr.bf16.mxu0 0
    %2062 = vmatpush1.bf16.xpose.msra.mxu0 %v2036
    %2063 = vmatprep.subr.bf16.mxu0 0
    %2064 = vmatpush2.bf16.xpose.msra.mxu0 0
    %2065 = vmatprep.subr.bf16.mxu0 0
    %2066 = vmatpush2.bf16.xpose.msra.mxu0 0
    %2067 = vmatprep.subr.bf16.mxu0 0
    %2068 = vmatpush2.bf16.xpose.msra.mxu0 0
    %2069 = vmatprep.subr.bf16.mxu0 0
    %2070 = vmatpush2.bf16.xpose.msra.mxu0 0
    %2071 = vmatprep.subr.bf16.mxu0 0
    %2072 = vmatpush2.bf16.xpose.msra.mxu0 0
    %2073 = vmatprep.subr.bf16.mxu0 0
    %2074 = vmatpush2.bf16.xpose.msra.mxu0 0
    %2075 = vmatprep.subr.bf16.mxu0 0
    %2076 = vmatpush2.bf16.xpose.msra.mxu0 0
    %2077 = vmatprep.subr.bf16.mxu0 0
    %2078 = vmatpush2.bf16.xpose.msra.mxu0 0
    %2079 = vmatprep.mubr.bf16.mxu0 0
    %2080 = vmatmul.mubr.bf16.gmra.mxu0 %v2044
    %v2081 = vpop.f32.mrf.mxu0
    %v2082 = vadd.f32 %v2046, %v2081
    %v2083 = vpop.f32.mrf.mxu0
    %v2084 = vpop.f32.mrf.mxu0
    %v2085 = vpop.f32.mrf.mxu0
    %2086 = vdwg.mxu0
    %v2087 = vmul.f32 %v2082, 0.5
    %v2088 = vtanh.pop %v2087
    %v2089 = vadd.f32 %v2088, 1.0
    %v2090 = vmul.f32 %v2089, 0.5
    %2091 = vst [vmem:[#allocation10] sm:$0x1] %v2090
    // Predicated region
    $region70: #{tpu_custom_call.1} parent=1 // pred_check
      _
    $region71: #{tpu_custom_call.1} parent=1 // pred_check_branch
      %2093 = sbr.rel (0) target = $region73
    $region72: #{tpu_custom_call.1} parent=1 // pred_region
      %s2095 = ssub.s32 16, 16
      %2096 = vsyncadd [#allocation4], %s2095
      %s2098 = sshll.u32 [#allocation10], 4
      %s2099 = int_to_ptr.vmem [resolvable:$true] %s2098
      %2101 = dma.vmem_to_hbm [thread:$0]  %s2099, 16, %s13, [#allocation4]
    $region73: #{tpu_custom_call.1} parent=1 // pred_fallthru
      _
    // Predicated region
    $region74: #{tpu_custom_call.1} parent=1 // pred_check
      _
    $region75: #{tpu_custom_call.1} parent=1 // pred_check_branch
      %2103 = sbr.rel (0) target = $region77
    $region76: #{tpu_custom_call.1} parent=1 // pred_region
      %2104 = dma.done [#allocation4], 16
    $region77: #{tpu_custom_call.1} parent=1 // pred_fallthru
      _
    %2105 = vsyncpa [#allocation3], 1
    %2106 = vsyncpa [#allocation7], 1
    %2107 = vsyncpa [#allocation4], 1
    %2108 = vsyncpa [#allocation5], 1

</llo_original>
